<compile_context>
chip_gen: v7x
topology: tpu7x:2x2x1
jax: 0.10.0
libtpu: 0.0.40
codegen_flags: <defaults>
</compile_context>

<pallas_src>
import jax
import jax.numpy as jnp
from jax.experimental import pallas as pl
from jax.experimental.pallas import tpu as pltpu

INPUT_DIM = 32
IN_FEATURES = INPUT_DIM * INPUT_DIM * 3  # 3072
H1 = 64
H2 = 32
NUM_CLASSES = 10


def dnn_kernel(x_ref, w1_ref, b1_ref, w2_ref, b2_ref, w3_ref, b3_ref, o_ref):
    # fc1 + ReLU : (TB, 3072)bf16 @ (3072, 64)bf16 -> (TB, 64), f32 MXU acc
    h = jnp.dot(x_ref[...], w1_ref[...], preferred_element_type=jnp.float32)
    h = jnp.maximum(h + b1_ref[...], 0.0)

    # fc2 + ReLU : (TB, 64) @ (64, 32) -> (TB, 32), f32
    h = jnp.dot(h, w2_ref[...], preferred_element_type=jnp.float32)
    h = jnp.maximum(h + b2_ref[...], 0.0)

    # fc3 : (TB, 32) @ (32, 10) -> (TB, 10), f32
    logits = jnp.dot(h, w3_ref[...], preferred_element_type=jnp.float32)
    logits = logits + b3_ref[...]

    # log_softmax along dim=1 (numerically stable, over the 10 real classes)
    m = jnp.max(logits, axis=1, keepdims=True)
    shifted = logits - m
    lse = jnp.log(jnp.sum(jnp.exp(shifted), axis=1, keepdims=True))
    o_ref[...] = (shifted - lse).astype(o_ref.dtype)


def _round_up(a, m):
    return (a + m - 1) // m * m


def _resident(shape):
    # Operand is identical for every grid step (constant index_map): keep it
    # resident in VMEM and single-buffer it (no second, never-used DMA buffer).
    return pl.BlockSpec(shape, lambda i: (0, 0), pipeline_mode=pl.Buffered(1))


def dnn_forward(x, w1, b1, w2, b2, w3, b3, *, max_tile=1024):
    """x: (B, 3, 32, 32) or (B, 3072); w_i stored as (in, out); b_i as (out,)."""
    # Stream x (and w1) as bf16 -- ~2x on the HBM-read bottleneck.
    x2 = x.reshape(-1, IN_FEATURES).astype(jnp.bfloat16)
    B = x2.shape[0]

    # Batch tile: multiple of 8 sublanes, <= max_tile, and <= ~half the batch
    # so small/medium batches still create >= 2 grid tiles (v7x megacore).
    TB = max(8, min(max_tile, _round_up((B + 1) // 2, 8)))
    grid = ((B + TB - 1) // TB,)  # partial last block handled by Pallas masking

    w1 = w1.astype(jnp.bfloat16)
    w2 = w2.astype(jnp.float32)
    w3 = w3.astype(jnp.float32)
    b1r = b1.reshape(1, H1).astype(jnp.float32)
    b2r = b2.reshape(1, H2).astype(jnp.float32)
    b3r = b3.reshape(1, NUM_CLASSES).astype(jnp.float32)

    out = pl.pallas_call(
        dnn_kernel,
        out_shape=jax.ShapeDtypeStruct((B, NUM_CLASSES), jnp.float32),
        grid=grid,
        in_specs=[
            # x: tiled over batch -> double-buffered DMA pipeline on the
            # bandwidth-dominant stream.
            pl.BlockSpec((TB, IN_FEATURES), lambda i: (i, 0)),
            # weights / biases: resident in VMEM across all grid steps.
            _resident((IN_FEATURES, H1)),
            _resident((1, H1)),
            _resident((H1, H2)),
            _resident((1, H2)),
            _resident((H2, NUM_CLASSES)),
            _resident((1, NUM_CLASSES)),
        ],
        out_specs=pl.BlockSpec((TB, NUM_CLASSES), lambda i: (i, 0)),
        compiler_params=pltpu.CompilerParams(
            # Shard batch tiles across v7x's 2 TCs; harmless on 1-TC v5e/v6e.
            dimension_semantics=("parallel",),
            # ~12 MiB double-buffered bf16 x (TB=1024) + <2 MiB weights/output;
            # 48 MiB is under every generation's physical VMEM (64 MiB on v7x)
            # and leaves room to bump max_tile to 2048 on v7x.
            vmem_limit_bytes=48 * 1024 * 1024,
        ),
    )(x2, w1, b1r, w2, b2r, w3, b3r)

    return out


if __name__ == "__main__":
    key = jax.random.PRNGKey(0)
    kx, k1w, k1b, k2w, k2b, k3w, k3b = jax.random.split(key, 7)

    # Small CIFAR-like batch: (batch=2, channels=3, 32, 32)
    x = jax.random.normal(kx, (2, 3, INPUT_DIM, INPUT_DIM), dtype=jnp.float32)

    # Deterministic parameter init (mimics nn.Linear uniform(-1/sqrt(fan_in), +))
    def linear_init(kw, kb, fan_in, fan_out):
        bound = 1.0 / fan_in ** 0.5
        w = jax.random.uniform(kw, (fan_in, fan_out), minval=-bound, maxval=bound,
                               dtype=jnp.float32)
        b = jax.random.uniform(kb, (fan_out,), minval=-bound, maxval=bound,
                               dtype=jnp.float32)
        return w, b

    w1, b1 = linear_init(k1w, k1b, IN_FEATURES, H1)
    w2, b2 = linear_init(k2w, k2b, H1, H2)
    w3, b3 = linear_init(k3w, k3b, H2, NUM_CLASSES)

    out = dnn_forward(x, w1, b1, w2, b2, w3, b3)
    jax.block_until_ready(out)

    # Pure-JAX reference with matching bf16 quantization on the fc1 inputs
    # (bf16 streaming is an intentional approximation; tolerance reflects it).
    xf = x.reshape(-1, IN_FEATURES)
    h = jnp.dot(xf.astype(jnp.bfloat16), w1.astype(jnp.bfloat16),
                preferred_element_type=jnp.float32) + b1
    h = jnp.maximum(h, 0.0)
    h = jnp.maximum(jnp.dot(h, w2, precision="highest") + b2, 0.0)
    ref = jax.nn.log_softmax(jnp.dot(h, w3, precision="highest") + b3, axis=1)

    assert out.shape == (2, NUM_CLASSES)
    assert jnp.allclose(out, ref, atol=1e-2, rtol=1e-2), "mismatch vs reference"

    print("KERNEL_OK")
</pallas_src>

<mosaic_0001>
module attributes {stable_mosaic.version = 11 : i64} {
  func.func @dnn_kernel(%arg0: i32, %arg1: memref<8x3072xbf16, #tpu.memory_space<vmem>>, %arg2: memref<3072x64xbf16, #tpu.memory_space<vmem>>, %arg3: memref<1x64xf32, #tpu.memory_space<vmem>>, %arg4: memref<64x32xf32, #tpu.memory_space<vmem>>, %arg5: memref<1x32xf32, #tpu.memory_space<vmem>>, %arg6: memref<32x10xf32, #tpu.memory_space<vmem>>, %arg7: memref<1x10xf32, #tpu.memory_space<vmem>>, %arg8: memref<8x10xf32, #tpu.memory_space<vmem>>) attributes {dimension_semantics = [#tpu.dimension_semantics<parallel>], iteration_bounds = array<i64: 1>, scalar_prefetch = 0 : i64, scratch_operands = 0 : i64, tpu.core_type = #tpu.core_type<tc>, window_params = [{transform_indices = @transform_0, window_bounds = array<i64: 8, 3072>}, {pipeline_mode = #tpu.pipeline_mode<synchronous>, transform_indices = @transform_1, window_bounds = array<i64: 3072, 64>}, {pipeline_mode = #tpu.pipeline_mode<synchronous>, transform_indices = @transform_2, window_bounds = array<i64: 1, 64>}, {pipeline_mode = #tpu.pipeline_mode<synchronous>, transform_indices = @transform_3, window_bounds = array<i64: 64, 32>}, {pipeline_mode = #tpu.pipeline_mode<synchronous>, transform_indices = @transform_4, window_bounds = array<i64: 1, 32>}, {pipeline_mode = #tpu.pipeline_mode<synchronous>, transform_indices = @transform_5, window_bounds = array<i64: 32, 10>}, {pipeline_mode = #tpu.pipeline_mode<synchronous>, transform_indices = @transform_6, window_bounds = array<i64: 1, 10>}, {transform_indices = @transform_7, window_bounds = array<i64: 8, 10>}]} {
    %c0 = arith.constant 0 : index
    %c0_0 = arith.constant 0 : index
    %0 = vector.load %arg1[%c0, %c0_0] : memref<8x3072xbf16, #tpu.memory_space<vmem>>, vector<8x3072xbf16>
    %c0_1 = arith.constant 0 : index
    %c0_2 = arith.constant 0 : index
    %1 = vector.load %arg2[%c0_1, %c0_2] : memref<3072x64xbf16, #tpu.memory_space<vmem>>, vector<3072x64xbf16>
    %cst = arith.constant dense<0.000000e+00> : vector<8x64xf32>
    %2 = tpu.matmul %0, %1, %cst {dimension_numbers = #tpu.dot_dimension_numbers<[1], [0], [0], [1], [0, 0, 1, 1], [], []>} : vector<8x3072xbf16>, vector<3072x64xbf16>, vector<8x64xf32> -> vector<8x64xf32>
    %c0_3 = arith.constant 0 : index
    %c0_4 = arith.constant 0 : index
    %3 = vector.load %arg3[%c0_3, %c0_4] : memref<1x64xf32, #tpu.memory_space<vmem>>, vector<1x64xf32>
    %4 = vector.broadcast %3 : vector<1x64xf32> to vector<8x64xf32>
    %5 = arith.addf %2, %4 : vector<8x64xf32>
    %cst_5 = arith.constant 0.000000e+00 : f32
    %6 = vector.broadcast %cst_5 : f32 to vector<8x64xf32>
    %7 = arith.maximumf %5, %6 : vector<8x64xf32>
    %c0_6 = arith.constant 0 : index
    %c0_7 = arith.constant 0 : index
    %8 = vector.load %arg4[%c0_6, %c0_7] : memref<64x32xf32, #tpu.memory_space<vmem>>, vector<64x32xf32>
    %cst_8 = arith.constant dense<0.000000e+00> : vector<8x32xf32>
    %9 = tpu.matmul %7, %8, %cst_8 {dimension_numbers = #tpu.dot_dimension_numbers<[1], [0], [0], [1], [0, 0, 1, 1], [], []>} : vector<8x64xf32>, vector<64x32xf32>, vector<8x32xf32> -> vector<8x32xf32>
    %c0_9 = arith.constant 0 : index
    %c0_10 = arith.constant 0 : index
    %10 = vector.load %arg5[%c0_9, %c0_10] : memref<1x32xf32, #tpu.memory_space<vmem>>, vector<1x32xf32>
    %11 = vector.broadcast %10 : vector<1x32xf32> to vector<8x32xf32>
    %12 = arith.addf %9, %11 : vector<8x32xf32>
    %cst_11 = arith.constant 0.000000e+00 : f32
    %13 = vector.broadcast %cst_11 : f32 to vector<8x32xf32>
    %14 = arith.maximumf %12, %13 : vector<8x32xf32>
    %c0_12 = arith.constant 0 : index
    %c0_13 = arith.constant 0 : index
    %15 = vector.load %arg6[%c0_12, %c0_13] : memref<32x10xf32, #tpu.memory_space<vmem>>, vector<32x10xf32>
    %cst_14 = arith.constant dense<0.000000e+00> : vector<8x10xf32>
    %16 = tpu.matmul %14, %15, %cst_14 {dimension_numbers = #tpu.dot_dimension_numbers<[1], [0], [0], [1], [0, 0, 1, 1], [], []>} : vector<8x32xf32>, vector<32x10xf32>, vector<8x10xf32> -> vector<8x10xf32>
    %c0_15 = arith.constant 0 : index
    %c0_16 = arith.constant 0 : index
    %17 = vector.load %arg7[%c0_15, %c0_16] : memref<1x10xf32, #tpu.memory_space<vmem>>, vector<1x10xf32>
    %18 = vector.broadcast %17 : vector<1x10xf32> to vector<8x10xf32>
    %19 = arith.addf %16, %18 : vector<8x10xf32>
    %cst_17 = arith.constant dense<0xFF800000> : vector<8xf32>
    %20 = vector.multi_reduction <maximumf>, %19, %cst_17 [1] : vector<8x10xf32> to vector<8xf32>
    %21 = vector.shape_cast %20 : vector<8xf32> to vector<8x1xf32>
    %22 = vector.broadcast %21 : vector<8x1xf32> to vector<8x10xf32>
    %23 = arith.subf %19, %22 : vector<8x10xf32>
    %24 = math.exp %23 : vector<8x10xf32>
    %cst_18 = arith.constant dense<0.000000e+00> : vector<8xf32>
    %25 = vector.multi_reduction <add>, %24, %cst_18 [1] : vector<8x10xf32> to vector<8xf32>
    %26 = vector.shape_cast %25 : vector<8xf32> to vector<8x1xf32>
    %27 = math.log %26 : vector<8x1xf32>
    %28 = vector.broadcast %27 : vector<8x1xf32> to vector<8x10xf32>
    %29 = arith.subf %23, %28 : vector<8x10xf32>
    %c0_19 = arith.constant 0 : index
    %c0_20 = arith.constant 0 : index
    %30 = vector.load %arg8[%c0_19, %c0_20] : memref<8x10xf32, #tpu.memory_space<vmem>>, vector<8x10xf32>
    tpu.vector_store %arg8[%c0_19, %c0_20], %29 {strides = array<i32>} : memref<8x10xf32, #tpu.memory_space<vmem>>, vector<8x10xf32>,
    return
  }
  func.func @transform_0(%arg0: i32) -> (i32, i32) {
    %c0_i32 = arith.constant 0 : i32
    %c0_i32_0 = arith.constant 0 : i32
    return %arg0, %c0_i32 : i32, i32
  }
  func.func @transform_1(%arg0: i32) -> (i32, i32) {
    %c0_i32 = arith.constant 0 : i32
    %c0_i32_0 = arith.constant 0 : i32
    %c0_i32_1 = arith.constant 0 : i32
    return %c0_i32, %c0_i32_0 : i32, i32
  }
  func.func @transform_2(%arg0: i32) -> (i32, i32) {
    %c0_i32 = arith.constant 0 : i32
    %c0_i32_0 = arith.constant 0 : i32
    %c0_i32_1 = arith.constant 0 : i32
    return %c0_i32, %c0_i32_0 : i32, i32
  }
  func.func @transform_3(%arg0: i32) -> (i32, i32) {
    %c0_i32 = arith.constant 0 : i32
    %c0_i32_0 = arith.constant 0 : i32
    %c0_i32_1 = arith.constant 0 : i32
    return %c0_i32, %c0_i32_0 : i32, i32
  }
  func.func @transform_4(%arg0: i32) -> (i32, i32) {
    %c0_i32 = arith.constant 0 : i32
    %c0_i32_0 = arith.constant 0 : i32
    %c0_i32_1 = arith.constant 0 : i32
    return %c0_i32, %c0_i32_0 : i32, i32
  }
  func.func @transform_5(%arg0: i32) -> (i32, i32) {
    %c0_i32 = arith.constant 0 : i32
    %c0_i32_0 = arith.constant 0 : i32
    %c0_i32_1 = arith.constant 0 : i32
    return %c0_i32, %c0_i32_0 : i32, i32
  }
  func.func @transform_6(%arg0: i32) -> (i32, i32) {
    %c0_i32 = arith.constant 0 : i32
    %c0_i32_0 = arith.constant 0 : i32
    %c0_i32_1 = arith.constant 0 : i32
    return %c0_i32, %c0_i32_0 : i32, i32
  }
  func.func @transform_7(%arg0: i32) -> (i32, i32) {
    %c0_i32 = arith.constant 0 : i32
    %c0_i32_0 = arith.constant 0 : i32
    return %arg0, %c0_i32 : i32, i32
  }
}

</mosaic_0001>

<llo_original>
// kernel: tpu_custom_call.1
$region0: #{tpu_custom_call.1}
  #allocation0 [shape = 'u32[]', space=smem, size = 0x4, offset = 0x4, fixed_abs, tag = 'smem constant byte address 0x4 - core index']
  #allocation1 [shape = 'u32[144,128]{1,0:T(1,128)}', space=vmem, size = 0x12000, scoped, tag = 'internal scratch']
  %s0 = inlined_call_operand.vmem [shape: bf16[2,3072], index: 0, kind: input, shape index: {}]
  %s1 = inlined_call_operand.vmem [shape: bf16[3072,64], index: 1, kind: input, shape index: {}]
  %s2 = inlined_call_operand.vmem [shape: f32[1,64], index: 2, kind: input, shape index: {}]
  %s3 = inlined_call_operand.vmem [shape: f32[64,32], index: 3, kind: input, shape index: {}]
  %s4 = inlined_call_operand.vmem [shape: f32[1,32], index: 4, kind: input, shape index: {}]
  %s5 = inlined_call_operand.vmem [shape: f32[32,10], index: 5, kind: input, shape index: {}]
  %s6 = inlined_call_operand.vmem [shape: f32[1,10], index: 6, kind: input, shape index: {}]
  %s7 = inlined_call_operand.hbm [shape: f32[2,10], index: 7, kind: output, shape index: {}]
  %s8 = sld [smem:[#allocation0]]
  $region38: #{tpu_custom_call.1} parent=0
    _
  %s10 = ssub.s32 1, %s8
  %s11 = scalar_select 0, %s10, %s8
  $region1: #{tpu_custom_call.1} parent=0
    #allocation2 [shape = 'u8[4096]{0}', space=vmem, size = 0x1000, scoped, tag = 'output window, operand 0, single buffered']
    #allocation3 [shape = 's32[1]{0}', space=sflag, size = 0x4, scoped, tag = 'scoped memory for tpu_custom_call.1']
    %12 = vsyncpa [#allocation3], 0
    // Predicated region
    $region2: #{tpu_custom_call.1} parent=1 // pred_check
      _
    $region3: #{tpu_custom_call.1} parent=1 // pred_check_branch
      %14 = sbr.rel (0) target = $region5
    $region4: #{tpu_custom_call.1} parent=1 // pred_region
      _
    $region5: #{tpu_custom_call.1} parent=1 // pred_fallthru
      _
    // Predicated region
    $region6: #{tpu_custom_call.1} parent=1 // pred_check
      _
    $region7: #{tpu_custom_call.1} parent=1 // pred_check_branch
      %16 = sbr.rel (0) target = $region9
    $region8: #{tpu_custom_call.1} parent=1 // pred_region
      _
    $region9: #{tpu_custom_call.1} parent=1 // pred_fallthru
      _
    // Predicated region
    $region10: #{tpu_custom_call.1} parent=1 // pred_check
      _
    $region11: #{tpu_custom_call.1} parent=1 // pred_check_branch
      %18 = sbr.rel (0) target = $region13
    $region12: #{tpu_custom_call.1} parent=1 // pred_region
      _
    $region13: #{tpu_custom_call.1} parent=1 // pred_fallthru
      _
    // Predicated region
    $region14: #{tpu_custom_call.1} parent=1 // pred_check
      _
    $region15: #{tpu_custom_call.1} parent=1 // pred_check_branch
      %20 = sbr.rel (0) target = $region17
    $region16: #{tpu_custom_call.1} parent=1 // pred_region
      _
    $region17: #{tpu_custom_call.1} parent=1 // pred_fallthru
      _
    // Predicated region
    $region18: #{tpu_custom_call.1} parent=1 // pred_check
      _
    $region19: #{tpu_custom_call.1} parent=1 // pred_check_branch
      %22 = sbr.rel (0) target = $region21
    $region20: #{tpu_custom_call.1} parent=1 // pred_region
      _
    $region21: #{tpu_custom_call.1} parent=1 // pred_fallthru
      _
    // Predicated region
    $region22: #{tpu_custom_call.1} parent=1 // pred_check
      _
    $region23: #{tpu_custom_call.1} parent=1 // pred_check_branch
      %24 = sbr.rel (0) target = $region25
    $region24: #{tpu_custom_call.1} parent=1 // pred_region
      _
    $region25: #{tpu_custom_call.1} parent=1 // pred_fallthru
      _
    // Predicated region
    $region26: #{tpu_custom_call.1} parent=1 // pred_check
      _
    $region27: #{tpu_custom_call.1} parent=1 // pred_check_branch
      %26 = sbr.rel (0) target = $region29
    $region28: #{tpu_custom_call.1} parent=1 // pred_region
      _
    $region29: #{tpu_custom_call.1} parent=1 // pred_fallthru
      _
    %v28 = vld [vmem:[%s0] sm:$0xff]
    %v29 = vld [vmem:[%s0 + $0x8] sm:$0xff]
    %v30 = vld [vmem:[%s0 + $0x10] sm:$0xff]
    %v31 = vld [vmem:[%s0 + $0x18] sm:$0xff]
    %v32 = vld [vmem:[%s0 + $0x20] sm:$0xff]
    %v33 = vld [vmem:[%s0 + $0x28] sm:$0xff]
    %v34 = vld [vmem:[%s0 + $0x30] sm:$0xff]
    %v35 = vld [vmem:[%s0 + $0x38] sm:$0xff]
    %v36 = vld [vmem:[%s0 + $0x40] sm:$0xff]
    %v37 = vld [vmem:[%s0 + $0x48] sm:$0xff]
    %v38 = vld [vmem:[%s0 + $0x50] sm:$0xff]
    %v39 = vld [vmem:[%s0 + $0x58] sm:$0xff]
    %v40 = vld [vmem:[%s1] sm:$0xf]
    %v41 = vld [vmem:[%s1 + $0x4] sm:$0xf]
    %v42 = vld [vmem:[%s1 + $0x8] sm:$0xf]
    %v43 = vld [vmem:[%s1 + $0xc] sm:$0xf]
    %v44 = vld [vmem:[%s1 + $0x10] sm:$0xf]
    %v45 = vld [vmem:[%s1 + $0x14] sm:$0xf]
    %v46 = vld [vmem:[%s1 + $0x18] sm:$0xf]
    %v47 = vld [vmem:[%s1 + $0x1c] sm:$0xf]
    %v48 = vld [vmem:[%s1 + $0x20] sm:$0xf]
    %v49 = vld [vmem:[%s1 + $0x24] sm:$0xf]
    %v50 = vld [vmem:[%s1 + $0x28] sm:$0xf]
    %v51 = vld [vmem:[%s1 + $0x2c] sm:$0xf]
    %v52 = vld [vmem:[%s1 + $0x30] sm:$0xf]
    %v53 = vld [vmem:[%s1 + $0x34] sm:$0xf]
    %v54 = vld [vmem:[%s1 + $0x38] sm:$0xf]
    %v55 = vld [vmem:[%s1 + $0x3c] sm:$0xf]
    %v56 = vld [vmem:[%s1 + $0x40] sm:$0xf]
    %v57 = vld [vmem:[%s1 + $0x44] sm:$0xf]
    %v58 = vld [vmem:[%s1 + $0x48] sm:$0xf]
    %v59 = vld [vmem:[%s1 + $0x4c] sm:$0xf]
    %v60 = vld [vmem:[%s1 + $0x50] sm:$0xf]
    %v61 = vld [vmem:[%s1 + $0x54] sm:$0xf]
    %v62 = vld [vmem:[%s1 + $0x58] sm:$0xf]
    %v63 = vld [vmem:[%s1 + $0x5c] sm:$0xf]
    %v64 = vld [vmem:[%s1 + $0x60] sm:$0xf]
    %v65 = vld [vmem:[%s1 + $0x64] sm:$0xf]
    %v66 = vld [vmem:[%s1 + $0x68] sm:$0xf]
    %v67 = vld [vmem:[%s1 + $0x6c] sm:$0xf]
    %v68 = vld [vmem:[%s1 + $0x70] sm:$0xf]
    %v69 = vld [vmem:[%s1 + $0x74] sm:$0xf]
    %v70 = vld [vmem:[%s1 + $0x78] sm:$0xf]
    %v71 = vld [vmem:[%s1 + $0x7c] sm:$0xf]
    %v72 = vld [vmem:[%s1 + $0x80] sm:$0xf]
    %v73 = vld [vmem:[%s1 + $0x84] sm:$0xf]
    %v74 = vld [vmem:[%s1 + $0x88] sm:$0xf]
    %v75 = vld [vmem:[%s1 + $0x8c] sm:$0xf]
    %v76 = vld [vmem:[%s1 + $0x90] sm:$0xf]
    %v77 = vld [vmem:[%s1 + $0x94] sm:$0xf]
    %v78 = vld [vmem:[%s1 + $0x98] sm:$0xf]
    %v79 = vld [vmem:[%s1 + $0x9c] sm:$0xf]
    %v80 = vld [vmem:[%s1 + $0xa0] sm:$0xf]
    %v81 = vld [vmem:[%s1 + $0xa4] sm:$0xf]
    %v82 = vld [vmem:[%s1 + $0xa8] sm:$0xf]
    %v83 = vld [vmem:[%s1 + $0xac] sm:$0xf]
    %v84 = vld [vmem:[%s1 + $0xb0] sm:$0xf]
    %v85 = vld [vmem:[%s1 + $0xb4] sm:$0xf]
    %v86 = vld [vmem:[%s1 + $0xb8] sm:$0xf]
    %v87 = vld [vmem:[%s1 + $0xbc] sm:$0xf]
    %v88 = vld [vmem:[%s1 + $0xc0] sm:$0xf]
    %v89 = vld [vmem:[%s1 + $0xc4] sm:$0xf]
    %v90 = vld [vmem:[%s1 + $0xc8] sm:$0xf]
    %v91 = vld [vmem:[%s1 + $0xcc] sm:$0xf]
    %v92 = vld [vmem:[%s1 + $0xd0] sm:$0xf]
    %v93 = vld [vmem:[%s1 + $0xd4] sm:$0xf]
    %v94 = vld [vmem:[%s1 + $0xd8] sm:$0xf]
    %v95 = vld [vmem:[%s1 + $0xdc] sm:$0xf]
    %v96 = vld [vmem:[%s1 + $0xe0] sm:$0xf]
    %v97 = vld [vmem:[%s1 + $0xe4] sm:$0xf]
    %v98 = vld [vmem:[%s1 + $0xe8] sm:$0xf]
    %v99 = vld [vmem:[%s1 + $0xec] sm:$0xf]
    %v100 = vld [vmem:[%s1 + $0xf0] sm:$0xf]
    %v101 = vld [vmem:[%s1 + $0xf4] sm:$0xf]
    %v102 = vld [vmem:[%s1 + $0xf8] sm:$0xf]
    %v103 = vld [vmem:[%s1 + $0xfc] sm:$0xf]
    %v104 = vld [vmem:[%s1 + $0x100] sm:$0xf]
    %v105 = vld [vmem:[%s1 + $0x104] sm:$0xf]
    %v106 = vld [vmem:[%s1 + $0x108] sm:$0xf]
    %v107 = vld [vmem:[%s1 + $0x10c] sm:$0xf]
    %v108 = vld [vmem:[%s1 + $0x110] sm:$0xf]
    %v109 = vld [vmem:[%s1 + $0x114] sm:$0xf]
    %v110 = vld [vmem:[%s1 + $0x118] sm:$0xf]
    %v111 = vld [vmem:[%s1 + $0x11c] sm:$0xf]
    %v112 = vld [vmem:[%s1 + $0x120] sm:$0xf]
    %v113 = vld [vmem:[%s1 + $0x124] sm:$0xf]
    %v114 = vld [vmem:[%s1 + $0x128] sm:$0xf]
    %v115 = vld [vmem:[%s1 + $0x12c] sm:$0xf]
    %v116 = vld [vmem:[%s1 + $0x130] sm:$0xf]
    %v117 = vld [vmem:[%s1 + $0x134] sm:$0xf]
    %v118 = vld [vmem:[%s1 + $0x138] sm:$0xf]
    %v119 = vld [vmem:[%s1 + $0x13c] sm:$0xf]
    %v120 = vld [vmem:[%s1 + $0x140] sm:$0xf]
    %v121 = vld [vmem:[%s1 + $0x144] sm:$0xf]
    %v122 = vld [vmem:[%s1 + $0x148] sm:$0xf]
    %v123 = vld [vmem:[%s1 + $0x14c] sm:$0xf]
    %v124 = vld [vmem:[%s1 + $0x150] sm:$0xf]
    %v125 = vld [vmem:[%s1 + $0x154] sm:$0xf]
    %v126 = vld [vmem:[%s1 + $0x158] sm:$0xf]
    %v127 = vld [vmem:[%s1 + $0x15c] sm:$0xf]
    %v128 = vld [vmem:[%s1 + $0x160] sm:$0xf]
    %v129 = vld [vmem:[%s1 + $0x164] sm:$0xf]
    %v130 = vld [vmem:[%s1 + $0x168] sm:$0xf]
    %v131 = vld [vmem:[%s1 + $0x16c] sm:$0xf]
    %v132 = vld [vmem:[%s1 + $0x170] sm:$0xf]
    %v133 = vld [vmem:[%s1 + $0x174] sm:$0xf]
    %v134 = vld [vmem:[%s1 + $0x178] sm:$0xf]
    %v135 = vld [vmem:[%s1 + $0x17c] sm:$0xf]
    %v136 = vld [vmem:[%s1 + $0x180] sm:$0xf]
    %v137 = vld [vmem:[%s1 + $0x184] sm:$0xf]
    %v138 = vld [vmem:[%s1 + $0x188] sm:$0xf]
    %v139 = vld [vmem:[%s1 + $0x18c] sm:$0xf]
    %v140 = vld [vmem:[%s1 + $0x190] sm:$0xf]
    %v141 = vld [vmem:[%s1 + $0x194] sm:$0xf]
    %v142 = vld [vmem:[%s1 + $0x198] sm:$0xf]
    %v143 = vld [vmem:[%s1 + $0x19c] sm:$0xf]
    %v144 = vld [vmem:[%s1 + $0x1a0] sm:$0xf]
    %v145 = vld [vmem:[%s1 + $0x1a4] sm:$0xf]
    %v146 = vld [vmem:[%s1 + $0x1a8] sm:$0xf]
    %v147 = vld [vmem:[%s1 + $0x1ac] sm:$0xf]
    %v148 = vld [vmem:[%s1 + $0x1b0] sm:$0xf]
    %v149 = vld [vmem:[%s1 + $0x1b4] sm:$0xf]
    %v150 = vld [vmem:[%s1 + $0x1b8] sm:$0xf]
    %v151 = vld [vmem:[%s1 + $0x1bc] sm:$0xf]
    %v152 = vld [vmem:[%s1 + $0x1c0] sm:$0xf]
    %v153 = vld [vmem:[%s1 + $0x1c4] sm:$0xf]
    %v154 = vld [vmem:[%s1 + $0x1c8] sm:$0xf]
    %v155 = vld [vmem:[%s1 + $0x1cc] sm:$0xf]
    %v156 = vld [vmem:[%s1 + $0x1d0] sm:$0xf]
    %v157 = vld [vmem:[%s1 + $0x1d4] sm:$0xf]
    %v158 = vld [vmem:[%s1 + $0x1d8] sm:$0xf]
    %v159 = vld [vmem:[%s1 + $0x1dc] sm:$0xf]
    %v160 = vld [vmem:[%s1 + $0x1e0] sm:$0xf]
    %v161 = vld [vmem:[%s1 + $0x1e4] sm:$0xf]
    %v162 = vld [vmem:[%s1 + $0x1e8] sm:$0xf]
    %v163 = vld [vmem:[%s1 + $0x1ec] sm:$0xf]
    %v164 = vld [vmem:[%s1 + $0x1f0] sm:$0xf]
    %v165 = vld [vmem:[%s1 + $0x1f4] sm:$0xf]
    %v166 = vld [vmem:[%s1 + $0x1f8] sm:$0xf]
    %v167 = vld [vmem:[%s1 + $0x1fc] sm:$0xf]
    %v168 = vld [vmem:[%s1 + $0x200] sm:$0xf]
    %v169 = vld [vmem:[%s1 + $0x204] sm:$0xf]
    %v170 = vld [vmem:[%s1 + $0x208] sm:$0xf]
    %v171 = vld [vmem:[%s1 + $0x20c] sm:$0xf]
    %v172 = vld [vmem:[%s1 + $0x210] sm:$0xf]
    %v173 = vld [vmem:[%s1 + $0x214] sm:$0xf]
    %v174 = vld [vmem:[%s1 + $0x218] sm:$0xf]
    %v175 = vld [vmem:[%s1 + $0x21c] sm:$0xf]
    %v176 = vld [vmem:[%s1 + $0x220] sm:$0xf]
    %v177 = vld [vmem:[%s1 + $0x224] sm:$0xf]
    %v178 = vld [vmem:[%s1 + $0x228] sm:$0xf]
    %v179 = vld [vmem:[%s1 + $0x22c] sm:$0xf]
    %v180 = vld [vmem:[%s1 + $0x230] sm:$0xf]
    %v181 = vld [vmem:[%s1 + $0x234] sm:$0xf]
    %v182 = vld [vmem:[%s1 + $0x238] sm:$0xf]
    %v183 = vld [vmem:[%s1 + $0x23c] sm:$0xf]
    %v184 = vld [vmem:[%s1 + $0x240] sm:$0xf]
    %v185 = vld [vmem:[%s1 + $0x244] sm:$0xf]
    %v186 = vld [vmem:[%s1 + $0x248] sm:$0xf]
    %v187 = vld [vmem:[%s1 + $0x24c] sm:$0xf]
    %v188 = vld [vmem:[%s1 + $0x250] sm:$0xf]
    %v189 = vld [vmem:[%s1 + $0x254] sm:$0xf]
    %v190 = vld [vmem:[%s1 + $0x258] sm:$0xf]
    %v191 = vld [vmem:[%s1 + $0x25c] sm:$0xf]
    %v192 = vld [vmem:[%s1 + $0x260] sm:$0xf]
    %v193 = vld [vmem:[%s1 + $0x264] sm:$0xf]
    %v194 = vld [vmem:[%s1 + $0x268] sm:$0xf]
    %v195 = vld [vmem:[%s1 + $0x26c] sm:$0xf]
    %v196 = vld [vmem:[%s1 + $0x270] sm:$0xf]
    %v197 = vld [vmem:[%s1 + $0x274] sm:$0xf]
    %v198 = vld [vmem:[%s1 + $0x278] sm:$0xf]
    %v199 = vld [vmem:[%s1 + $0x27c] sm:$0xf]
    %v200 = vld [vmem:[%s1 + $0x280] sm:$0xf]
    %v201 = vld [vmem:[%s1 + $0x284] sm:$0xf]
    %v202 = vld [vmem:[%s1 + $0x288] sm:$0xf]
    %v203 = vld [vmem:[%s1 + $0x28c] sm:$0xf]
    %v204 = vld [vmem:[%s1 + $0x290] sm:$0xf]
    %v205 = vld [vmem:[%s1 + $0x294] sm:$0xf]
    %v206 = vld [vmem:[%s1 + $0x298] sm:$0xf]
    %v207 = vld [vmem:[%s1 + $0x29c] sm:$0xf]
    %v208 = vld [vmem:[%s1 + $0x2a0] sm:$0xf]
    %v209 = vld [vmem:[%s1 + $0x2a4] sm:$0xf]
    %v210 = vld [vmem:[%s1 + $0x2a8] sm:$0xf]
    %v211 = vld [vmem:[%s1 + $0x2ac] sm:$0xf]
    %v212 = vld [vmem:[%s1 + $0x2b0] sm:$0xf]
    %v213 = vld [vmem:[%s1 + $0x2b4] sm:$0xf]
    %v214 = vld [vmem:[%s1 + $0x2b8] sm:$0xf]
    %v215 = vld [vmem:[%s1 + $0x2bc] sm:$0xf]
    %v216 = vld [vmem:[%s1 + $0x2c0] sm:$0xf]
    %v217 = vld [vmem:[%s1 + $0x2c4] sm:$0xf]
    %v218 = vld [vmem:[%s1 + $0x2c8] sm:$0xf]
    %v219 = vld [vmem:[%s1 + $0x2cc] sm:$0xf]
    %v220 = vld [vmem:[%s1 + $0x2d0] sm:$0xf]
    %v221 = vld [vmem:[%s1 + $0x2d4] sm:$0xf]
    %v222 = vld [vmem:[%s1 + $0x2d8] sm:$0xf]
    %v223 = vld [vmem:[%s1 + $0x2dc] sm:$0xf]
    %v224 = vld [vmem:[%s1 + $0x2e0] sm:$0xf]
    %v225 = vld [vmem:[%s1 + $0x2e4] sm:$0xf]
    %v226 = vld [vmem:[%s1 + $0x2e8] sm:$0xf]
    %v227 = vld [vmem:[%s1 + $0x2ec] sm:$0xf]
    %v228 = vld [vmem:[%s1 + $0x2f0] sm:$0xf]
    %v229 = vld [vmem:[%s1 + $0x2f4] sm:$0xf]
    %v230 = vld [vmem:[%s1 + $0x2f8] sm:$0xf]
    %v231 = vld [vmem:[%s1 + $0x2fc] sm:$0xf]
    %v232 = vld [vmem:[%s1 + $0x300] sm:$0xf]
    %v233 = vld [vmem:[%s1 + $0x304] sm:$0xf]
    %v234 = vld [vmem:[%s1 + $0x308] sm:$0xf]
    %v235 = vld [vmem:[%s1 + $0x30c] sm:$0xf]
    %v236 = vld [vmem:[%s1 + $0x310] sm:$0xf]
    %v237 = vld [vmem:[%s1 + $0x314] sm:$0xf]
    %v238 = vld [vmem:[%s1 + $0x318] sm:$0xf]
    %v239 = vld [vmem:[%s1 + $0x31c] sm:$0xf]
    %v240 = vld [vmem:[%s1 + $0x320] sm:$0xf]
    %v241 = vld [vmem:[%s1 + $0x324] sm:$0xf]
    %v242 = vld [vmem:[%s1 + $0x328] sm:$0xf]
    %v243 = vld [vmem:[%s1 + $0x32c] sm:$0xf]
    %v244 = vld [vmem:[%s1 + $0x330] sm:$0xf]
    %v245 = vld [vmem:[%s1 + $0x334] sm:$0xf]
    %v246 = vld [vmem:[%s1 + $0x338] sm:$0xf]
    %v247 = vld [vmem:[%s1 + $0x33c] sm:$0xf]
    %v248 = vld [vmem:[%s1 + $0x340] sm:$0xf]
    %v249 = vld [vmem:[%s1 + $0x344] sm:$0xf]
    %v250 = vld [vmem:[%s1 + $0x348] sm:$0xf]
    %v251 = vld [vmem:[%s1 + $0x34c] sm:$0xf]
    %v252 = vld [vmem:[%s1 + $0x350] sm:$0xf]
    %v253 = vld [vmem:[%s1 + $0x354] sm:$0xf]
    %v254 = vld [vmem:[%s1 + $0x358] sm:$0xf]
    %v255 = vld [vmem:[%s1 + $0x35c] sm:$0xf]
    %v256 = vld [vmem:[%s1 + $0x360] sm:$0xf]
    %v257 = vld [vmem:[%s1 + $0x364] sm:$0xf]
    %v258 = vld [vmem:[%s1 + $0x368] sm:$0xf]
    %v259 = vld [vmem:[%s1 + $0x36c] sm:$0xf]
    %v260 = vld [vmem:[%s1 + $0x370] sm:$0xf]
    %v261 = vld [vmem:[%s1 + $0x374] sm:$0xf]
    %v262 = vld [vmem:[%s1 + $0x378] sm:$0xf]
    %v263 = vld [vmem:[%s1 + $0x37c] sm:$0xf]
    %v264 = vld [vmem:[%s1 + $0x380] sm:$0xf]
    %v265 = vld [vmem:[%s1 + $0x384] sm:$0xf]
    %v266 = vld [vmem:[%s1 + $0x388] sm:$0xf]
    %v267 = vld [vmem:[%s1 + $0x38c] sm:$0xf]
    %v268 = vld [vmem:[%s1 + $0x390] sm:$0xf]
    %v269 = vld [vmem:[%s1 + $0x394] sm:$0xf]
    %v270 = vld [vmem:[%s1 + $0x398] sm:$0xf]
    %v271 = vld [vmem:[%s1 + $0x39c] sm:$0xf]
    %v272 = vld [vmem:[%s1 + $0x3a0] sm:$0xf]
    %v273 = vld [vmem:[%s1 + $0x3a4] sm:$0xf]
    %v274 = vld [vmem:[%s1 + $0x3a8] sm:$0xf]
    %v275 = vld [vmem:[%s1 + $0x3ac] sm:$0xf]
    %v276 = vld [vmem:[%s1 + $0x3b0] sm:$0xf]
    %v277 = vld [vmem:[%s1 + $0x3b4] sm:$0xf]
    %v278 = vld [vmem:[%s1 + $0x3b8] sm:$0xf]
    %v279 = vld [vmem:[%s1 + $0x3bc] sm:$0xf]
    %v280 = vld [vmem:[%s1 + $0x3c0] sm:$0xf]
    %v281 = vld [vmem:[%s1 + $0x3c4] sm:$0xf]
    %v282 = vld [vmem:[%s1 + $0x3c8] sm:$0xf]
    %v283 = vld [vmem:[%s1 + $0x3cc] sm:$0xf]
    %v284 = vld [vmem:[%s1 + $0x3d0] sm:$0xf]
    %v285 = vld [vmem:[%s1 + $0x3d4] sm:$0xf]
    %v286 = vld [vmem:[%s1 + $0x3d8] sm:$0xf]
    %v287 = vld [vmem:[%s1 + $0x3dc] sm:$0xf]
    %v288 = vld [vmem:[%s1 + $0x3e0] sm:$0xf]
    %v289 = vld [vmem:[%s1 + $0x3e4] sm:$0xf]
    %v290 = vld [vmem:[%s1 + $0x3e8] sm:$0xf]
    %v291 = vld [vmem:[%s1 + $0x3ec] sm:$0xf]
    %v292 = vld [vmem:[%s1 + $0x3f0] sm:$0xf]
    %v293 = vld [vmem:[%s1 + $0x3f4] sm:$0xf]
    %v294 = vld [vmem:[%s1 + $0x3f8] sm:$0xf]
    %v295 = vld [vmem:[%s1 + $0x3fc] sm:$0xf]
    %v296 = vld [vmem:[%s1 + $0x400] sm:$0xf]
    %v297 = vld [vmem:[%s1 + $0x404] sm:$0xf]
    %v298 = vld [vmem:[%s1 + $0x408] sm:$0xf]
    %v299 = vld [vmem:[%s1 + $0x40c] sm:$0xf]
    %v300 = vld [vmem:[%s1 + $0x410] sm:$0xf]
    %v301 = vld [vmem:[%s1 + $0x414] sm:$0xf]
    %v302 = vld [vmem:[%s1 + $0x418] sm:$0xf]
    %v303 = vld [vmem:[%s1 + $0x41c] sm:$0xf]
    %v304 = vld [vmem:[%s1 + $0x420] sm:$0xf]
    %v305 = vld [vmem:[%s1 + $0x424] sm:$0xf]
    %v306 = vld [vmem:[%s1 + $0x428] sm:$0xf]
    %v307 = vld [vmem:[%s1 + $0x42c] sm:$0xf]
    %v308 = vld [vmem:[%s1 + $0x430] sm:$0xf]
    %v309 = vld [vmem:[%s1 + $0x434] sm:$0xf]
    %v310 = vld [vmem:[%s1 + $0x438] sm:$0xf]
    %v311 = vld [vmem:[%s1 + $0x43c] sm:$0xf]
    %v312 = vld [vmem:[%s1 + $0x440] sm:$0xf]
    %v313 = vld [vmem:[%s1 + $0x444] sm:$0xf]
    %v314 = vld [vmem:[%s1 + $0x448] sm:$0xf]
    %v315 = vld [vmem:[%s1 + $0x44c] sm:$0xf]
    %v316 = vld [vmem:[%s1 + $0x450] sm:$0xf]
    %v317 = vld [vmem:[%s1 + $0x454] sm:$0xf]
    %v318 = vld [vmem:[%s1 + $0x458] sm:$0xf]
    %v319 = vld [vmem:[%s1 + $0x45c] sm:$0xf]
    %v320 = vld [vmem:[%s1 + $0x460] sm:$0xf]
    %v321 = vld [vmem:[%s1 + $0x464] sm:$0xf]
    %v322 = vld [vmem:[%s1 + $0x468] sm:$0xf]
    %v323 = vld [vmem:[%s1 + $0x46c] sm:$0xf]
    %v324 = vld [vmem:[%s1 + $0x470] sm:$0xf]
    %v325 = vld [vmem:[%s1 + $0x474] sm:$0xf]
    %v326 = vld [vmem:[%s1 + $0x478] sm:$0xf]
    %v327 = vld [vmem:[%s1 + $0x47c] sm:$0xf]
    %v328 = vld [vmem:[%s1 + $0x480] sm:$0xf]
    %v329 = vld [vmem:[%s1 + $0x484] sm:$0xf]
    %v330 = vld [vmem:[%s1 + $0x488] sm:$0xf]
    %v331 = vld [vmem:[%s1 + $0x48c] sm:$0xf]
    %v332 = vld [vmem:[%s1 + $0x490] sm:$0xf]
    %v333 = vld [vmem:[%s1 + $0x494] sm:$0xf]
    %v334 = vld [vmem:[%s1 + $0x498] sm:$0xf]
    %v335 = vld [vmem:[%s1 + $0x49c] sm:$0xf]
    %v336 = vld [vmem:[%s1 + $0x4a0] sm:$0xf]
    %v337 = vld [vmem:[%s1 + $0x4a4] sm:$0xf]
    %v338 = vld [vmem:[%s1 + $0x4a8] sm:$0xf]
    %v339 = vld [vmem:[%s1 + $0x4ac] sm:$0xf]
    %v340 = vld [vmem:[%s1 + $0x4b0] sm:$0xf]
    %v341 = vld [vmem:[%s1 + $0x4b4] sm:$0xf]
    %v342 = vld [vmem:[%s1 + $0x4b8] sm:$0xf]
    %v343 = vld [vmem:[%s1 + $0x4bc] sm:$0xf]
    %v344 = vld [vmem:[%s1 + $0x4c0] sm:$0xf]
    %v345 = vld [vmem:[%s1 + $0x4c4] sm:$0xf]
    %v346 = vld [vmem:[%s1 + $0x4c8] sm:$0xf]
    %v347 = vld [vmem:[%s1 + $0x4cc] sm:$0xf]
    %v348 = vld [vmem:[%s1 + $0x4d0] sm:$0xf]
    %v349 = vld [vmem:[%s1 + $0x4d4] sm:$0xf]
    %v350 = vld [vmem:[%s1 + $0x4d8] sm:$0xf]
    %v351 = vld [vmem:[%s1 + $0x4dc] sm:$0xf]
    %v352 = vld [vmem:[%s1 + $0x4e0] sm:$0xf]
    %v353 = vld [vmem:[%s1 + $0x4e4] sm:$0xf]
    %v354 = vld [vmem:[%s1 + $0x4e8] sm:$0xf]
    %v355 = vld [vmem:[%s1 + $0x4ec] sm:$0xf]
    %v356 = vld [vmem:[%s1 + $0x4f0] sm:$0xf]
    %v357 = vld [vmem:[%s1 + $0x4f4] sm:$0xf]
    %v358 = vld [vmem:[%s1 + $0x4f8] sm:$0xf]
    %v359 = vld [vmem:[%s1 + $0x4fc] sm:$0xf]
    %v360 = vld [vmem:[%s1 + $0x500] sm:$0xf]
    %v361 = vld [vmem:[%s1 + $0x504] sm:$0xf]
    %v362 = vld [vmem:[%s1 + $0x508] sm:$0xf]
    %v363 = vld [vmem:[%s1 + $0x50c] sm:$0xf]
    %v364 = vld [vmem:[%s1 + $0x510] sm:$0xf]
    %v365 = vld [vmem:[%s1 + $0x514] sm:$0xf]
    %v366 = vld [vmem:[%s1 + $0x518] sm:$0xf]
    %v367 = vld [vmem:[%s1 + $0x51c] sm:$0xf]
    %v368 = vld [vmem:[%s1 + $0x520] sm:$0xf]
    %v369 = vld [vmem:[%s1 + $0x524] sm:$0xf]
    %v370 = vld [vmem:[%s1 + $0x528] sm:$0xf]
    %v371 = vld [vmem:[%s1 + $0x52c] sm:$0xf]
    %v372 = vld [vmem:[%s1 + $0x530] sm:$0xf]
    %v373 = vld [vmem:[%s1 + $0x534] sm:$0xf]
    %v374 = vld [vmem:[%s1 + $0x538] sm:$0xf]
    %v375 = vld [vmem:[%s1 + $0x53c] sm:$0xf]
    %v376 = vld [vmem:[%s1 + $0x540] sm:$0xf]
    %v377 = vld [vmem:[%s1 + $0x544] sm:$0xf]
    %v378 = vld [vmem:[%s1 + $0x548] sm:$0xf]
    %v379 = vld [vmem:[%s1 + $0x54c] sm:$0xf]
    %v380 = vld [vmem:[%s1 + $0x550] sm:$0xf]
    %v381 = vld [vmem:[%s1 + $0x554] sm:$0xf]
    %v382 = vld [vmem:[%s1 + $0x558] sm:$0xf]
    %v383 = vld [vmem:[%s1 + $0x55c] sm:$0xf]
    %v384 = vld [vmem:[%s1 + $0x560] sm:$0xf]
    %v385 = vld [vmem:[%s1 + $0x564] sm:$0xf]
    %v386 = vld [vmem:[%s1 + $0x568] sm:$0xf]
    %v387 = vld [vmem:[%s1 + $0x56c] sm:$0xf]
    %v388 = vld [vmem:[%s1 + $0x570] sm:$0xf]
    %v389 = vld [vmem:[%s1 + $0x574] sm:$0xf]
    %v390 = vld [vmem:[%s1 + $0x578] sm:$0xf]
    %v391 = vld [vmem:[%s1 + $0x57c] sm:$0xf]
    %v392 = vld [vmem:[%s1 + $0x580] sm:$0xf]
    %v393 = vld [vmem:[%s1 + $0x584] sm:$0xf]
    %v394 = vld [vmem:[%s1 + $0x588] sm:$0xf]
    %v395 = vld [vmem:[%s1 + $0x58c] sm:$0xf]
    %v396 = vld [vmem:[%s1 + $0x590] sm:$0xf]
    %v397 = vld [vmem:[%s1 + $0x594] sm:$0xf]
    %v398 = vld [vmem:[%s1 + $0x598] sm:$0xf]
    %v399 = vld [vmem:[%s1 + $0x59c] sm:$0xf]
    %v400 = vld [vmem:[%s1 + $0x5a0] sm:$0xf]
    %v401 = vld [vmem:[%s1 + $0x5a4] sm:$0xf]
    %v402 = vld [vmem:[%s1 + $0x5a8] sm:$0xf]
    %v403 = vld [vmem:[%s1 + $0x5ac] sm:$0xf]
    %v404 = vld [vmem:[%s1 + $0x5b0] sm:$0xf]
    %v405 = vld [vmem:[%s1 + $0x5b4] sm:$0xf]
    %v406 = vld [vmem:[%s1 + $0x5b8] sm:$0xf]
    %v407 = vld [vmem:[%s1 + $0x5bc] sm:$0xf]
    %v408 = vld [vmem:[%s1 + $0x5c0] sm:$0xf]
    %v409 = vld [vmem:[%s1 + $0x5c4] sm:$0xf]
    %v410 = vld [vmem:[%s1 + $0x5c8] sm:$0xf]
    %v411 = vld [vmem:[%s1 + $0x5cc] sm:$0xf]
    %v412 = vld [vmem:[%s1 + $0x5d0] sm:$0xf]
    %v413 = vld [vmem:[%s1 + $0x5d4] sm:$0xf]
    %v414 = vld [vmem:[%s1 + $0x5d8] sm:$0xf]
    %v415 = vld [vmem:[%s1 + $0x5dc] sm:$0xf]
    %v416 = vld [vmem:[%s1 + $0x5e0] sm:$0xf]
    %v417 = vld [vmem:[%s1 + $0x5e4] sm:$0xf]
    %v418 = vld [vmem:[%s1 + $0x5e8] sm:$0xf]
    %v419 = vld [vmem:[%s1 + $0x5ec] sm:$0xf]
    %v420 = vld [vmem:[%s1 + $0x5f0] sm:$0xf]
    %v421 = vld [vmem:[%s1 + $0x5f4] sm:$0xf]
    %v422 = vld [vmem:[%s1 + $0x5f8] sm:$0xf]
    %v423 = vld [vmem:[%s1 + $0x5fc] sm:$0xf]
    %v424 = vld [vmem:[%s2] sm:$0x1]
    %v426 = vlaneseq
    %v427 = vshrl.u32 %v426, 7
    %v428 = vsub.s32 0, %v427
    %v429 = vrot.slane %v424, %v428
    %v443 = vcombine.low %v28, %v31
    %v444 = vcombine.high %v28, %v31
    %v445 = vcombine.low %v34, %v37
    %v446 = vcombine.high %v34, %v37
    %v448 = vunpack.c.l.s4 1966171168
    %v449 = vunpack.c.0.s8 %v448
    %v450 = vlaneseq
    %v451 = vshrl.u32 %v450, 7
    %v452 = vsub.s32 %v449, %v451
    %v453 = vrot.slane %v443, %v452
    %v455 = vunpack.c.l.s4 1966171168
    %v456 = vunpack.c.0.s8 %v455
    %v457 = vlaneseq
    %v458 = vshrl.u32 %v457, 7
    %v459 = vsub.s32 %v456, %v458
    %v460 = vrot.slane %v444, %v459
    %v462 = vunpack.c.l.s4 1966171168
    %v463 = vunpack.c.0.s8 %v462
    %v464 = vlaneseq
    %v465 = vshrl.u32 %v464, 7
    %v466 = vsub.s32 %v463, %v465
    %v467 = vrot.slane %v445, %v466
    %v469 = vunpack.c.l.s4 1966171168
    %v470 = vunpack.c.0.s8 %v469
    %v471 = vlaneseq
    %v472 = vshrl.u32 %v471, 7
    %v473 = vsub.s32 %v470, %v472
    %v474 = vrot.slane %v446, %v473
    %v475 = vcombine.low %v453, %v467
    %v476 = vcombine.high %v453, %v467
    %v477 = vcombine.low %v460, %v474
    %v478 = vcombine.high %v460, %v474
    %v480 = vunpack.c.l.s4 1966171168
    %v481 = vunpack.c.0.s8 %v480
    %v482 = vlaneseq
    %v483 = vshrl.u32 %v482, 7
    %v484 = vsub.s32 %v481, %v483
    %v485 = vrot.slane %v475, %v484
    %v487 = vunpack.c.l.s4 1966171168
    %v488 = vunpack.c.0.s8 %v487
    %v489 = vlaneseq
    %v490 = vshrl.u32 %v489, 7
    %v491 = vsub.s32 %v488, %v490
    %v492 = vrot.slane %v477, %v491
    %v494 = vunpack.c.l.s4 1966171168
    %v495 = vunpack.c.0.s8 %v494
    %v496 = vlaneseq
    %v497 = vshrl.u32 %v496, 7
    %v498 = vsub.s32 %v495, %v497
    %v499 = vrot.slane %v476, %v498
    %v501 = vunpack.c.l.s4 1966171168
    %v502 = vunpack.c.0.s8 %v501
    %v503 = vlaneseq
    %v504 = vshrl.u32 %v503, 7
    %v505 = vsub.s32 %v502, %v504
    %v506 = vrot.slane %v478, %v505
    %v507 = vcombine.high %v485, %v485
    %v508 = vcombine.high %v492, %v492
    %v509 = vcombine.high %v499, %v499
    %v510 = vcombine.high %v506, %v506
    %v511 = vcombine.low %v29, %v32
    %v512 = vcombine.high %v29, %v32
    %v513 = vcombine.low %v35, %v38
    %v514 = vcombine.high %v35, %v38
    %v516 = vunpack.c.l.s4 1966171168
    %v517 = vunpack.c.0.s8 %v516
    %v518 = vlaneseq
    %v519 = vshrl.u32 %v518, 7
    %v520 = vsub.s32 %v517, %v519
    %v521 = vrot.slane %v511, %v520
    %v523 = vunpack.c.l.s4 1966171168
    %v524 = vunpack.c.0.s8 %v523
    %v525 = vlaneseq
    %v526 = vshrl.u32 %v525, 7
    %v527 = vsub.s32 %v524, %v526
    %v528 = vrot.slane %v512, %v527
    %v530 = vunpack.c.l.s4 1966171168
    %v531 = vunpack.c.0.s8 %v530
    %v532 = vlaneseq
    %v533 = vshrl.u32 %v532, 7
    %v534 = vsub.s32 %v531, %v533
    %v535 = vrot.slane %v513, %v534
    %v537 = vunpack.c.l.s4 1966171168
    %v538 = vunpack.c.0.s8 %v537
    %v539 = vlaneseq
    %v540 = vshrl.u32 %v539, 7
    %v541 = vsub.s32 %v538, %v540
    %v542 = vrot.slane %v514, %v541
    %v543 = vcombine.low %v521, %v535
    %v544 = vcombine.high %v521, %v535
    %v545 = vcombine.low %v528, %v542
    %v546 = vcombine.high %v528, %v542
    %v548 = vunpack.c.l.s4 1966171168
    %v549 = vunpack.c.0.s8 %v548
    %v550 = vlaneseq
    %v551 = vshrl.u32 %v550, 7
    %v552 = vsub.s32 %v549, %v551
    %v553 = vrot.slane %v543, %v552
    %v555 = vunpack.c.l.s4 1966171168
    %v556 = vunpack.c.0.s8 %v555
    %v557 = vlaneseq
    %v558 = vshrl.u32 %v557, 7
    %v559 = vsub.s32 %v556, %v558
    %v560 = vrot.slane %v545, %v559
    %v562 = vunpack.c.l.s4 1966171168
    %v563 = vunpack.c.0.s8 %v562
    %v564 = vlaneseq
    %v565 = vshrl.u32 %v564, 7
    %v566 = vsub.s32 %v563, %v565
    %v567 = vrot.slane %v544, %v566
    %v569 = vunpack.c.l.s4 1966171168
    %v570 = vunpack.c.0.s8 %v569
    %v571 = vlaneseq
    %v572 = vshrl.u32 %v571, 7
    %v573 = vsub.s32 %v570, %v572
    %v574 = vrot.slane %v546, %v573
    %v575 = vcombine.high %v553, %v553
    %v576 = vcombine.high %v560, %v560
    %v577 = vcombine.high %v567, %v567
    %v578 = vcombine.high %v574, %v574
    %v579 = vcombine.low %v30, %v33
    %v580 = vcombine.high %v30, %v33
    %v581 = vcombine.low %v36, %v39
    %v582 = vcombine.high %v36, %v39
    %v584 = vunpack.c.l.s4 1966171168
    %v585 = vunpack.c.0.s8 %v584
    %v586 = vlaneseq
    %v587 = vshrl.u32 %v586, 7
    %v588 = vsub.s32 %v585, %v587
    %v589 = vrot.slane %v579, %v588
    %v591 = vunpack.c.l.s4 1966171168
    %v592 = vunpack.c.0.s8 %v591
    %v593 = vlaneseq
    %v594 = vshrl.u32 %v593, 7
    %v595 = vsub.s32 %v592, %v594
    %v596 = vrot.slane %v580, %v595
    %v598 = vunpack.c.l.s4 1966171168
    %v599 = vunpack.c.0.s8 %v598
    %v600 = vlaneseq
    %v601 = vshrl.u32 %v600, 7
    %v602 = vsub.s32 %v599, %v601
    %v603 = vrot.slane %v581, %v602
    %v605 = vunpack.c.l.s4 1966171168
    %v606 = vunpack.c.0.s8 %v605
    %v607 = vlaneseq
    %v608 = vshrl.u32 %v607, 7
    %v609 = vsub.s32 %v606, %v608
    %v610 = vrot.slane %v582, %v609
    %v611 = vcombine.low %v589, %v603
    %v612 = vcombine.high %v589, %v603
    %v613 = vcombine.low %v596, %v610
    %v614 = vcombine.high %v596, %v610
    %v616 = vunpack.c.l.s4 1966171168
    %v617 = vunpack.c.0.s8 %v616
    %v618 = vlaneseq
    %v619 = vshrl.u32 %v618, 7
    %v620 = vsub.s32 %v617, %v619
    %v621 = vrot.slane %v611, %v620
    %v623 = vunpack.c.l.s4 1966171168
    %v624 = vunpack.c.0.s8 %v623
    %v625 = vlaneseq
    %v626 = vshrl.u32 %v625, 7
    %v627 = vsub.s32 %v624, %v626
    %v628 = vrot.slane %v613, %v627
    %v630 = vunpack.c.l.s4 1966171168
    %v631 = vunpack.c.0.s8 %v630
    %v632 = vlaneseq
    %v633 = vshrl.u32 %v632, 7
    %v634 = vsub.s32 %v631, %v633
    %v635 = vrot.slane %v612, %v634
    %v637 = vunpack.c.l.s4 1966171168
    %v638 = vunpack.c.0.s8 %v637
    %v639 = vlaneseq
    %v640 = vshrl.u32 %v639, 7
    %v641 = vsub.s32 %v638, %v640
    %v642 = vrot.slane %v614, %v641
    %v643 = vcombine.high %v621, %v621
    %v644 = vcombine.high %v628, %v628
    %v645 = vcombine.high %v635, %v635
    %v646 = vcombine.high %v642, %v642
    %v1055 = vunpack.c.l.b16 %v40
    %v1056 = vunpack.c.l.b16 %v41
    %v1057 = vunpack.c.l.b16 %v42
    %v1058 = vunpack.c.l.b16 %v43
    %v1059 = vunpack.c.l.b16 %v44
    %v1060 = vunpack.c.l.b16 %v45
    %v1061 = vunpack.c.l.b16 %v46
    %v1062 = vunpack.c.l.b16 %v47
    %v1063 = vunpack.c.l.b16 %v48
    %v1064 = vunpack.c.l.b16 %v49
    %v1065 = vunpack.c.l.b16 %v50
    %v1066 = vunpack.c.l.b16 %v51
    %v1067 = vunpack.c.l.b16 %v52
    %v1068 = vunpack.c.l.b16 %v53
    %v1069 = vunpack.c.l.b16 %v54
    %v1070 = vunpack.c.l.b16 %v55
    %v1071 = vunpack.c.l.b16 %v56
    %v1072 = vunpack.c.l.b16 %v57
    %v1073 = vunpack.c.l.b16 %v58
    %v1074 = vunpack.c.l.b16 %v59
    %v1075 = vunpack.c.l.b16 %v60
    %v1076 = vunpack.c.l.b16 %v61
    %v1077 = vunpack.c.l.b16 %v62
    %v1078 = vunpack.c.l.b16 %v63
    %v1079 = vunpack.c.l.b16 %v64
    %v1080 = vunpack.c.l.b16 %v65
    %v1081 = vunpack.c.l.b16 %v66
    %v1082 = vunpack.c.l.b16 %v67
    %v1083 = vunpack.c.l.b16 %v68
    %v1084 = vunpack.c.l.b16 %v69
    %v1085 = vunpack.c.l.b16 %v70
    %v1086 = vunpack.c.l.b16 %v71
    %v1087 = vunpack.c.l.b16 %v72
    %v1088 = vunpack.c.l.b16 %v73
    %v1089 = vunpack.c.l.b16 %v74
    %v1090 = vunpack.c.l.b16 %v75
    %v1091 = vunpack.c.l.b16 %v76
    %v1092 = vunpack.c.l.b16 %v77
    %v1093 = vunpack.c.l.b16 %v78
    %v1094 = vunpack.c.l.b16 %v79
    %v1095 = vunpack.c.l.b16 %v80
    %v1096 = vunpack.c.l.b16 %v81
    %v1097 = vunpack.c.l.b16 %v82
    %v1098 = vunpack.c.l.b16 %v83
    %v1099 = vunpack.c.l.b16 %v84
    %v1100 = vunpack.c.l.b16 %v85
    %v1101 = vunpack.c.l.b16 %v86
    %v1102 = vunpack.c.l.b16 %v87
    %v1103 = vunpack.c.l.b16 %v88
    %v1104 = vunpack.c.l.b16 %v89
    %v1105 = vunpack.c.l.b16 %v90
    %v1106 = vunpack.c.l.b16 %v91
    %v1107 = vunpack.c.l.b16 %v92
    %v1108 = vunpack.c.l.b16 %v93
    %v1109 = vunpack.c.l.b16 %v94
    %v1110 = vunpack.c.l.b16 %v95
    %v1111 = vunpack.c.l.b16 %v96
    %v1112 = vunpack.c.l.b16 %v97
    %v1113 = vunpack.c.l.b16 %v98
    %v1114 = vunpack.c.l.b16 %v99
    %v1115 = vunpack.c.l.b16 %v100
    %v1116 = vunpack.c.l.b16 %v101
    %v1117 = vunpack.c.l.b16 %v102
    %v1118 = vunpack.c.l.b16 %v103
    %v1119 = vunpack.c.l.b16 %v104
    %v1120 = vunpack.c.l.b16 %v105
    %v1121 = vunpack.c.l.b16 %v106
    %v1122 = vunpack.c.l.b16 %v107
    %v1123 = vunpack.c.l.b16 %v108
    %v1124 = vunpack.c.l.b16 %v109
    %v1125 = vunpack.c.l.b16 %v110
    %v1126 = vunpack.c.l.b16 %v111
    %v1127 = vunpack.c.l.b16 %v112
    %v1128 = vunpack.c.l.b16 %v113
    %v1129 = vunpack.c.l.b16 %v114
    %v1130 = vunpack.c.l.b16 %v115
    %v1131 = vunpack.c.l.b16 %v116
    %v1132 = vunpack.c.l.b16 %v117
    %v1133 = vunpack.c.l.b16 %v118
    %v1134 = vunpack.c.l.b16 %v119
    %v1135 = vunpack.c.l.b16 %v120
    %v1136 = vunpack.c.l.b16 %v121
    %v1137 = vunpack.c.l.b16 %v122
    %v1138 = vunpack.c.l.b16 %v123
    %v1139 = vunpack.c.l.b16 %v124
    %v1140 = vunpack.c.l.b16 %v125
    %v1141 = vunpack.c.l.b16 %v126
    %v1142 = vunpack.c.l.b16 %v127
    %v1143 = vunpack.c.l.b16 %v128
    %v1144 = vunpack.c.l.b16 %v129
    %v1145 = vunpack.c.l.b16 %v130
    %v1146 = vunpack.c.l.b16 %v131
    %v1147 = vunpack.c.l.b16 %v132
    %v1148 = vunpack.c.l.b16 %v133
    %v1149 = vunpack.c.l.b16 %v134
    %v1150 = vunpack.c.l.b16 %v135
    %v1151 = vunpack.c.l.b16 %v136
    %v1152 = vunpack.c.l.b16 %v137
    %v1153 = vunpack.c.l.b16 %v138
    %v1154 = vunpack.c.l.b16 %v139
    %v1155 = vunpack.c.l.b16 %v140
    %v1156 = vunpack.c.l.b16 %v141
    %v1157 = vunpack.c.l.b16 %v142
    %v1158 = vunpack.c.l.b16 %v143
    %v1159 = vunpack.c.l.b16 %v144
    %v1160 = vunpack.c.l.b16 %v145
    %v1161 = vunpack.c.l.b16 %v146
    %v1162 = vunpack.c.l.b16 %v147
    %v1163 = vunpack.c.l.b16 %v148
    %v1164 = vunpack.c.l.b16 %v149
    %v1165 = vunpack.c.l.b16 %v150
    %v1166 = vunpack.c.l.b16 %v151
    %v1167 = vunpack.c.l.b16 %v152
    %v1168 = vunpack.c.l.b16 %v153
    %v1169 = vunpack.c.l.b16 %v154
    %v1170 = vunpack.c.l.b16 %v155
    %v1171 = vunpack.c.l.b16 %v156
    %v1172 = vunpack.c.l.b16 %v157
    %v1173 = vunpack.c.l.b16 %v158
    %v1174 = vunpack.c.l.b16 %v159
    %v1175 = vunpack.c.l.b16 %v160
    %v1176 = vunpack.c.l.b16 %v161
    %v1177 = vunpack.c.l.b16 %v162
    %v1178 = vunpack.c.l.b16 %v163
    %v1179 = vunpack.c.l.b16 %v164
    %v1180 = vunpack.c.l.b16 %v165
    %v1181 = vunpack.c.l.b16 %v166
    %v1182 = vunpack.c.l.b16 %v167
    %v1183 = vunpack.c.l.b16 %v168
    %v1184 = vunpack.c.l.b16 %v169
    %v1185 = vunpack.c.l.b16 %v170
    %v1186 = vunpack.c.l.b16 %v171
    %v1187 = vunpack.c.l.b16 %v172
    %v1188 = vunpack.c.l.b16 %v173
    %v1189 = vunpack.c.l.b16 %v174
    %v1190 = vunpack.c.l.b16 %v175
    %v1191 = vunpack.c.l.b16 %v176
    %v1192 = vunpack.c.l.b16 %v177
    %v1193 = vunpack.c.l.b16 %v178
    %v1194 = vunpack.c.l.b16 %v179
    %v1195 = vunpack.c.l.b16 %v180
    %v1196 = vunpack.c.l.b16 %v181
    %v1197 = vunpack.c.l.b16 %v182
    %v1198 = vunpack.c.l.b16 %v183
    %v1199 = vunpack.c.l.b16 %v184
    %v1200 = vunpack.c.l.b16 %v185
    %v1201 = vunpack.c.l.b16 %v186
    %v1202 = vunpack.c.l.b16 %v187
    %v1203 = vunpack.c.l.b16 %v188
    %v1204 = vunpack.c.l.b16 %v189
    %v1205 = vunpack.c.l.b16 %v190
    %v1206 = vunpack.c.l.b16 %v191
    %v1207 = vunpack.c.l.b16 %v192
    %v1208 = vunpack.c.l.b16 %v193
    %v1209 = vunpack.c.l.b16 %v194
    %v1210 = vunpack.c.l.b16 %v195
    %v1211 = vunpack.c.l.b16 %v196
    %v1212 = vunpack.c.l.b16 %v197
    %v1213 = vunpack.c.l.b16 %v198
    %v1214 = vunpack.c.l.b16 %v199
    %v1215 = vunpack.c.l.b16 %v200
    %v1216 = vunpack.c.l.b16 %v201
    %v1217 = vunpack.c.l.b16 %v202
    %v1218 = vunpack.c.l.b16 %v203
    %v1219 = vunpack.c.l.b16 %v204
    %v1220 = vunpack.c.l.b16 %v205
    %v1221 = vunpack.c.l.b16 %v206
    %v1222 = vunpack.c.l.b16 %v207
    %v1223 = vunpack.c.l.b16 %v208
    %v1224 = vunpack.c.l.b16 %v209
    %v1225 = vunpack.c.l.b16 %v210
    %v1226 = vunpack.c.l.b16 %v211
    %v1227 = vunpack.c.l.b16 %v212
    %v1228 = vunpack.c.l.b16 %v213
    %v1229 = vunpack.c.l.b16 %v214
    %v1230 = vunpack.c.l.b16 %v215
    %v1231 = vunpack.c.l.b16 %v216
    %v1232 = vunpack.c.l.b16 %v217
    %v1233 = vunpack.c.l.b16 %v218
    %v1234 = vunpack.c.l.b16 %v219
    %v1235 = vunpack.c.l.b16 %v220
    %v1236 = vunpack.c.l.b16 %v221
    %v1237 = vunpack.c.l.b16 %v222
    %v1238 = vunpack.c.l.b16 %v223
    %v1239 = vunpack.c.l.b16 %v224
    %v1240 = vunpack.c.l.b16 %v225
    %v1241 = vunpack.c.l.b16 %v226
    %v1242 = vunpack.c.l.b16 %v227
    %v1243 = vunpack.c.l.b16 %v228
    %v1244 = vunpack.c.l.b16 %v229
    %v1245 = vunpack.c.l.b16 %v230
    %v1246 = vunpack.c.l.b16 %v231
    %v1247 = vunpack.c.l.b16 %v232
    %v1248 = vunpack.c.l.b16 %v233
    %v1249 = vunpack.c.l.b16 %v234
    %v1250 = vunpack.c.l.b16 %v235
    %v1251 = vunpack.c.l.b16 %v236
    %v1252 = vunpack.c.l.b16 %v237
    %v1253 = vunpack.c.l.b16 %v238
    %v1254 = vunpack.c.l.b16 %v239
    %v1255 = vunpack.c.l.b16 %v240
    %v1256 = vunpack.c.l.b16 %v241
    %v1257 = vunpack.c.l.b16 %v242
    %v1258 = vunpack.c.l.b16 %v243
    %v1259 = vunpack.c.l.b16 %v244
    %v1260 = vunpack.c.l.b16 %v245
    %v1261 = vunpack.c.l.b16 %v246
    %v1262 = vunpack.c.l.b16 %v247
    %v1263 = vunpack.c.l.b16 %v248
    %v1264 = vunpack.c.l.b16 %v249
    %v1265 = vunpack.c.l.b16 %v250
    %v1266 = vunpack.c.l.b16 %v251
    %v1267 = vunpack.c.l.b16 %v252
    %v1268 = vunpack.c.l.b16 %v253
    %v1269 = vunpack.c.l.b16 %v254
    %v1270 = vunpack.c.l.b16 %v255
    %v1271 = vunpack.c.l.b16 %v256
    %v1272 = vunpack.c.l.b16 %v257
    %v1273 = vunpack.c.l.b16 %v258
    %v1274 = vunpack.c.l.b16 %v259
    %v1275 = vunpack.c.l.b16 %v260
    %v1276 = vunpack.c.l.b16 %v261
    %v1277 = vunpack.c.l.b16 %v262
    %v1278 = vunpack.c.l.b16 %v263
    %v1279 = vunpack.c.l.b16 %v264
    %v1280 = vunpack.c.l.b16 %v265
    %v1281 = vunpack.c.l.b16 %v266
    %v1282 = vunpack.c.l.b16 %v267
    %v1283 = vunpack.c.l.b16 %v268
    %v1284 = vunpack.c.l.b16 %v269
    %v1285 = vunpack.c.l.b16 %v270
    %v1286 = vunpack.c.l.b16 %v271
    %v1287 = vunpack.c.l.b16 %v272
    %v1288 = vunpack.c.l.b16 %v273
    %v1289 = vunpack.c.l.b16 %v274
    %v1290 = vunpack.c.l.b16 %v275
    %v1291 = vunpack.c.l.b16 %v276
    %v1292 = vunpack.c.l.b16 %v277
    %v1293 = vunpack.c.l.b16 %v278
    %v1294 = vunpack.c.l.b16 %v279
    %v1295 = vunpack.c.l.b16 %v280
    %v1296 = vunpack.c.l.b16 %v281
    %v1297 = vunpack.c.l.b16 %v282
    %v1298 = vunpack.c.l.b16 %v283
    %v1299 = vunpack.c.l.b16 %v284
    %v1300 = vunpack.c.l.b16 %v285
    %v1301 = vunpack.c.l.b16 %v286
    %v1302 = vunpack.c.l.b16 %v287
    %v1303 = vunpack.c.l.b16 %v288
    %v1304 = vunpack.c.l.b16 %v289
    %v1305 = vunpack.c.l.b16 %v290
    %v1306 = vunpack.c.l.b16 %v291
    %v1307 = vunpack.c.l.b16 %v292
    %v1308 = vunpack.c.l.b16 %v293
    %v1309 = vunpack.c.l.b16 %v294
    %v1310 = vunpack.c.l.b16 %v295
    %v1311 = vunpack.c.l.b16 %v296
    %v1312 = vunpack.c.l.b16 %v297
    %v1313 = vunpack.c.l.b16 %v298
    %v1314 = vunpack.c.l.b16 %v299
    %v1315 = vunpack.c.l.b16 %v300
    %v1316 = vunpack.c.l.b16 %v301
    %v1317 = vunpack.c.l.b16 %v302
    %v1318 = vunpack.c.l.b16 %v303
    %v1319 = vunpack.c.l.b16 %v304
    %v1320 = vunpack.c.l.b16 %v305
    %v1321 = vunpack.c.l.b16 %v306
    %v1322 = vunpack.c.l.b16 %v307
    %v1323 = vunpack.c.l.b16 %v308
    %v1324 = vunpack.c.l.b16 %v309
    %v1325 = vunpack.c.l.b16 %v310
    %v1326 = vunpack.c.l.b16 %v311
    %v1327 = vunpack.c.l.b16 %v312
    %v1328 = vunpack.c.l.b16 %v313
    %v1329 = vunpack.c.l.b16 %v314
    %v1330 = vunpack.c.l.b16 %v315
    %v1331 = vunpack.c.l.b16 %v316
    %v1332 = vunpack.c.l.b16 %v317
    %v1333 = vunpack.c.l.b16 %v318
    %v1334 = vunpack.c.l.b16 %v319
    %v1335 = vunpack.c.l.b16 %v320
    %v1336 = vunpack.c.l.b16 %v321
    %v1337 = vunpack.c.l.b16 %v322
    %v1338 = vunpack.c.l.b16 %v323
    %v1339 = vunpack.c.l.b16 %v324
    %v1340 = vunpack.c.l.b16 %v325
    %v1341 = vunpack.c.l.b16 %v326
    %v1342 = vunpack.c.l.b16 %v327
    %v1343 = vunpack.c.l.b16 %v328
    %v1344 = vunpack.c.l.b16 %v329
    %v1345 = vunpack.c.l.b16 %v330
    %v1346 = vunpack.c.l.b16 %v331
    %v1347 = vunpack.c.l.b16 %v332
    %v1348 = vunpack.c.l.b16 %v333
    %v1349 = vunpack.c.l.b16 %v334
    %v1350 = vunpack.c.l.b16 %v335
    %v1351 = vunpack.c.l.b16 %v336
    %v1352 = vunpack.c.l.b16 %v337
    %v1353 = vunpack.c.l.b16 %v338
    %v1354 = vunpack.c.l.b16 %v339
    %v1355 = vunpack.c.l.b16 %v340
    %v1356 = vunpack.c.l.b16 %v341
    %v1357 = vunpack.c.l.b16 %v342
    %v1358 = vunpack.c.l.b16 %v343
    %v1359 = vunpack.c.l.b16 %v344
    %v1360 = vunpack.c.l.b16 %v345
    %v1361 = vunpack.c.l.b16 %v346
    %v1362 = vunpack.c.l.b16 %v347
    %v1363 = vunpack.c.l.b16 %v348
    %v1364 = vunpack.c.l.b16 %v349
    %v1365 = vunpack.c.l.b16 %v350
    %v1366 = vunpack.c.l.b16 %v351
    %v1367 = vunpack.c.l.b16 %v352
    %v1368 = vunpack.c.l.b16 %v353
    %v1369 = vunpack.c.l.b16 %v354
    %v1370 = vunpack.c.l.b16 %v355
    %v1371 = vunpack.c.l.b16 %v356
    %v1372 = vunpack.c.l.b16 %v357
    %v1373 = vunpack.c.l.b16 %v358
    %v1374 = vunpack.c.l.b16 %v359
    %v1375 = vunpack.c.l.b16 %v360
    %v1376 = vunpack.c.l.b16 %v361
    %v1377 = vunpack.c.l.b16 %v362
    %v1378 = vunpack.c.l.b16 %v363
    %v1379 = vunpack.c.l.b16 %v364
    %v1380 = vunpack.c.l.b16 %v365
    %v1381 = vunpack.c.l.b16 %v366
    %v1382 = vunpack.c.l.b16 %v367
    %v1383 = vunpack.c.l.b16 %v368
    %v1384 = vunpack.c.l.b16 %v369
    %v1385 = vunpack.c.l.b16 %v370
    %v1386 = vunpack.c.l.b16 %v371
    %v1387 = vunpack.c.l.b16 %v372
    %v1388 = vunpack.c.l.b16 %v373
    %v1389 = vunpack.c.l.b16 %v374
    %v1390 = vunpack.c.l.b16 %v375
    %v1391 = vunpack.c.l.b16 %v376
    %v1392 = vunpack.c.l.b16 %v377
    %v1393 = vunpack.c.l.b16 %v378
    %v1394 = vunpack.c.l.b16 %v379
    %v1395 = vunpack.c.l.b16 %v380
    %v1396 = vunpack.c.l.b16 %v381
    %v1397 = vunpack.c.l.b16 %v382
    %v1398 = vunpack.c.l.b16 %v383
    %v1399 = vunpack.c.l.b16 %v384
    %v1400 = vunpack.c.l.b16 %v385
    %v1401 = vunpack.c.l.b16 %v386
    %v1402 = vunpack.c.l.b16 %v387
    %v1403 = vunpack.c.l.b16 %v388
    %v1404 = vunpack.c.l.b16 %v389
    %v1405 = vunpack.c.l.b16 %v390
    %v1406 = vunpack.c.l.b16 %v391
    %v1407 = vunpack.c.l.b16 %v392
    %v1408 = vunpack.c.l.b16 %v393
    %v1409 = vunpack.c.l.b16 %v394
    %v1410 = vunpack.c.l.b16 %v395
    %v1411 = vunpack.c.l.b16 %v396
    %v1412 = vunpack.c.l.b16 %v397
    %v1413 = vunpack.c.l.b16 %v398
    %v1414 = vunpack.c.l.b16 %v399
    %v1415 = vunpack.c.l.b16 %v400
    %v1416 = vunpack.c.l.b16 %v401
    %v1417 = vunpack.c.l.b16 %v402
    %v1418 = vunpack.c.l.b16 %v403
    %v1419 = vunpack.c.l.b16 %v404
    %v1420 = vunpack.c.l.b16 %v405
    %v1421 = vunpack.c.l.b16 %v406
    %v1422 = vunpack.c.l.b16 %v407
    %v1423 = vunpack.c.l.b16 %v408
    %v1424 = vunpack.c.l.b16 %v409
    %v1425 = vunpack.c.l.b16 %v410
    %v1426 = vunpack.c.l.b16 %v411
    %v1427 = vunpack.c.l.b16 %v412
    %v1428 = vunpack.c.l.b16 %v413
    %v1429 = vunpack.c.l.b16 %v414
    %v1430 = vunpack.c.l.b16 %v415
    %v1431 = vunpack.c.l.b16 %v416
    %v1432 = vunpack.c.l.b16 %v417
    %v1433 = vunpack.c.l.b16 %v418
    %v1434 = vunpack.c.l.b16 %v419
    %v1435 = vunpack.c.l.b16 %v420
    %v1436 = vunpack.c.l.b16 %v421
    %v1437 = vunpack.c.l.b16 %v422
    %v1438 = vunpack.c.l.b16 %v423
    %v1439 = vpack.c.b16 %v1056, %v1055
    %v1440 = vpack.c.b16 %v1058, %v1057
    %v1441 = vpack.c.b16 %v1060, %v1059
    %v1442 = vpack.c.b16 %v1062, %v1061
    %v1443 = vpack.c.b16 %v1064, %v1063
    %v1444 = vpack.c.b16 %v1066, %v1065
    %v1445 = vpack.c.b16 %v1068, %v1067
    %v1446 = vpack.c.b16 %v1070, %v1069
    %v1447 = vpack.c.b16 %v1072, %v1071
    %v1448 = vpack.c.b16 %v1074, %v1073
    %v1449 = vpack.c.b16 %v1076, %v1075
    %v1450 = vpack.c.b16 %v1078, %v1077
    %v1451 = vpack.c.b16 %v1080, %v1079
    %v1452 = vpack.c.b16 %v1082, %v1081
    %v1453 = vpack.c.b16 %v1084, %v1083
    %v1454 = vpack.c.b16 %v1086, %v1085
    %v1455 = vpack.c.b16 %v1088, %v1087
    %v1456 = vpack.c.b16 %v1090, %v1089
    %v1457 = vpack.c.b16 %v1092, %v1091
    %v1458 = vpack.c.b16 %v1094, %v1093
    %v1459 = vpack.c.b16 %v1096, %v1095
    %v1460 = vpack.c.b16 %v1098, %v1097
    %v1461 = vpack.c.b16 %v1100, %v1099
    %v1462 = vpack.c.b16 %v1102, %v1101
    %v1463 = vpack.c.b16 %v1104, %v1103
    %v1464 = vpack.c.b16 %v1106, %v1105
    %v1465 = vpack.c.b16 %v1108, %v1107
    %v1466 = vpack.c.b16 %v1110, %v1109
    %v1467 = vpack.c.b16 %v1112, %v1111
    %v1468 = vpack.c.b16 %v1114, %v1113
    %v1469 = vpack.c.b16 %v1116, %v1115
    %v1470 = vpack.c.b16 %v1118, %v1117
    %v1471 = vpack.c.b16 %v1120, %v1119
    %v1472 = vpack.c.b16 %v1122, %v1121
    %v1473 = vpack.c.b16 %v1124, %v1123
    %v1474 = vpack.c.b16 %v1126, %v1125
    %v1475 = vpack.c.b16 %v1128, %v1127
    %v1476 = vpack.c.b16 %v1130, %v1129
    %v1477 = vpack.c.b16 %v1132, %v1131
    %v1478 = vpack.c.b16 %v1134, %v1133
    %v1479 = vpack.c.b16 %v1136, %v1135
    %v1480 = vpack.c.b16 %v1138, %v1137
    %v1481 = vpack.c.b16 %v1140, %v1139
    %v1482 = vpack.c.b16 %v1142, %v1141
    %v1483 = vpack.c.b16 %v1144, %v1143
    %v1484 = vpack.c.b16 %v1146, %v1145
    %v1485 = vpack.c.b16 %v1148, %v1147
    %v1486 = vpack.c.b16 %v1150, %v1149
    %v1487 = vpack.c.b16 %v1152, %v1151
    %v1488 = vpack.c.b16 %v1154, %v1153
    %v1489 = vpack.c.b16 %v1156, %v1155
    %v1490 = vpack.c.b16 %v1158, %v1157
    %v1491 = vpack.c.b16 %v1160, %v1159
    %v1492 = vpack.c.b16 %v1162, %v1161
    %v1493 = vpack.c.b16 %v1164, %v1163
    %v1494 = vpack.c.b16 %v1166, %v1165
    %v1495 = vpack.c.b16 %v1168, %v1167
    %v1496 = vpack.c.b16 %v1170, %v1169
    %v1497 = vpack.c.b16 %v1172, %v1171
    %v1498 = vpack.c.b16 %v1174, %v1173
    %v1499 = vpack.c.b16 %v1176, %v1175
    %v1500 = vpack.c.b16 %v1178, %v1177
    %v1501 = vpack.c.b16 %v1180, %v1179
    %v1502 = vpack.c.b16 %v1182, %v1181
    %v1503 = vpack.c.b16 %v1184, %v1183
    %v1504 = vpack.c.b16 %v1186, %v1185
    %v1505 = vpack.c.b16 %v1188, %v1187
    %v1506 = vpack.c.b16 %v1190, %v1189
    %v1507 = vpack.c.b16 %v1192, %v1191
    %v1508 = vpack.c.b16 %v1194, %v1193
    %v1509 = vpack.c.b16 %v1196, %v1195
    %v1510 = vpack.c.b16 %v1198, %v1197
    %v1511 = vpack.c.b16 %v1200, %v1199
    %v1512 = vpack.c.b16 %v1202, %v1201
    %v1513 = vpack.c.b16 %v1204, %v1203
    %v1514 = vpack.c.b16 %v1206, %v1205
    %v1515 = vpack.c.b16 %v1208, %v1207
    %v1516 = vpack.c.b16 %v1210, %v1209
    %v1517 = vpack.c.b16 %v1212, %v1211
    %v1518 = vpack.c.b16 %v1214, %v1213
    %v1519 = vpack.c.b16 %v1216, %v1215
    %v1520 = vpack.c.b16 %v1218, %v1217
    %v1521 = vpack.c.b16 %v1220, %v1219
    %v1522 = vpack.c.b16 %v1222, %v1221
    %v1523 = vpack.c.b16 %v1224, %v1223
    %v1524 = vpack.c.b16 %v1226, %v1225
    %v1525 = vpack.c.b16 %v1228, %v1227
    %v1526 = vpack.c.b16 %v1230, %v1229
    %v1527 = vpack.c.b16 %v1232, %v1231
    %v1528 = vpack.c.b16 %v1234, %v1233
    %v1529 = vpack.c.b16 %v1236, %v1235
    %v1530 = vpack.c.b16 %v1238, %v1237
    %v1531 = vpack.c.b16 %v1240, %v1239
    %v1532 = vpack.c.b16 %v1242, %v1241
    %v1533 = vpack.c.b16 %v1244, %v1243
    %v1534 = vpack.c.b16 %v1246, %v1245
    %v1535 = vpack.c.b16 %v1248, %v1247
    %v1536 = vpack.c.b16 %v1250, %v1249
    %v1537 = vpack.c.b16 %v1252, %v1251
    %v1538 = vpack.c.b16 %v1254, %v1253
    %v1539 = vpack.c.b16 %v1256, %v1255
    %v1540 = vpack.c.b16 %v1258, %v1257
    %v1541 = vpack.c.b16 %v1260, %v1259
    %v1542 = vpack.c.b16 %v1262, %v1261
    %v1543 = vpack.c.b16 %v1264, %v1263
    %v1544 = vpack.c.b16 %v1266, %v1265
    %v1545 = vpack.c.b16 %v1268, %v1267
    %v1546 = vpack.c.b16 %v1270, %v1269
    %v1547 = vpack.c.b16 %v1272, %v1271
    %v1548 = vpack.c.b16 %v1274, %v1273
    %v1549 = vpack.c.b16 %v1276, %v1275
    %v1550 = vpack.c.b16 %v1278, %v1277
    %v1551 = vpack.c.b16 %v1280, %v1279
    %v1552 = vpack.c.b16 %v1282, %v1281
    %v1553 = vpack.c.b16 %v1284, %v1283
    %v1554 = vpack.c.b16 %v1286, %v1285
    %v1555 = vpack.c.b16 %v1288, %v1287
    %v1556 = vpack.c.b16 %v1290, %v1289
    %v1557 = vpack.c.b16 %v1292, %v1291
    %v1558 = vpack.c.b16 %v1294, %v1293
    %v1559 = vpack.c.b16 %v1296, %v1295
    %v1560 = vpack.c.b16 %v1298, %v1297
    %v1561 = vpack.c.b16 %v1300, %v1299
    %v1562 = vpack.c.b16 %v1302, %v1301
    %v1563 = vpack.c.b16 %v1304, %v1303
    %v1564 = vpack.c.b16 %v1306, %v1305
    %v1565 = vpack.c.b16 %v1308, %v1307
    %v1566 = vpack.c.b16 %v1310, %v1309
    %v1567 = vpack.c.b16 %v1312, %v1311
    %v1568 = vpack.c.b16 %v1314, %v1313
    %v1569 = vpack.c.b16 %v1316, %v1315
    %v1570 = vpack.c.b16 %v1318, %v1317
    %v1571 = vpack.c.b16 %v1320, %v1319
    %v1572 = vpack.c.b16 %v1322, %v1321
    %v1573 = vpack.c.b16 %v1324, %v1323
    %v1574 = vpack.c.b16 %v1326, %v1325
    %v1575 = vpack.c.b16 %v1328, %v1327
    %v1576 = vpack.c.b16 %v1330, %v1329
    %v1577 = vpack.c.b16 %v1332, %v1331
    %v1578 = vpack.c.b16 %v1334, %v1333
    %v1579 = vpack.c.b16 %v1336, %v1335
    %v1580 = vpack.c.b16 %v1338, %v1337
    %v1581 = vpack.c.b16 %v1340, %v1339
    %v1582 = vpack.c.b16 %v1342, %v1341
    %v1583 = vpack.c.b16 %v1344, %v1343
    %v1584 = vpack.c.b16 %v1346, %v1345
    %v1585 = vpack.c.b16 %v1348, %v1347
    %v1586 = vpack.c.b16 %v1350, %v1349
    %v1587 = vpack.c.b16 %v1352, %v1351
    %v1588 = vpack.c.b16 %v1354, %v1353
    %v1589 = vpack.c.b16 %v1356, %v1355
    %v1590 = vpack.c.b16 %v1358, %v1357
    %v1591 = vpack.c.b16 %v1360, %v1359
    %v1592 = vpack.c.b16 %v1362, %v1361
    %v1593 = vpack.c.b16 %v1364, %v1363
    %v1594 = vpack.c.b16 %v1366, %v1365
    %v1595 = vpack.c.b16 %v1368, %v1367
    %v1596 = vpack.c.b16 %v1370, %v1369
    %v1597 = vpack.c.b16 %v1372, %v1371
    %v1598 = vpack.c.b16 %v1374, %v1373
    %v1599 = vpack.c.b16 %v1376, %v1375
    %v1600 = vpack.c.b16 %v1378, %v1377
    %v1601 = vpack.c.b16 %v1380, %v1379
    %v1602 = vpack.c.b16 %v1382, %v1381
    %v1603 = vpack.c.b16 %v1384, %v1383
    %v1604 = vpack.c.b16 %v1386, %v1385
    %v1605 = vpack.c.b16 %v1388, %v1387
    %v1606 = vpack.c.b16 %v1390, %v1389
    %v1607 = vpack.c.b16 %v1392, %v1391
    %v1608 = vpack.c.b16 %v1394, %v1393
    %v1609 = vpack.c.b16 %v1396, %v1395
    %v1610 = vpack.c.b16 %v1398, %v1397
    %v1611 = vpack.c.b16 %v1400, %v1399
    %v1612 = vpack.c.b16 %v1402, %v1401
    %v1613 = vpack.c.b16 %v1404, %v1403
    %v1614 = vpack.c.b16 %v1406, %v1405
    %v1615 = vpack.c.b16 %v1408, %v1407
    %v1616 = vpack.c.b16 %v1410, %v1409
    %v1617 = vpack.c.b16 %v1412, %v1411
    %v1618 = vpack.c.b16 %v1414, %v1413
    %v1619 = vpack.c.b16 %v1416, %v1415
    %v1620 = vpack.c.b16 %v1418, %v1417
    %v1621 = vpack.c.b16 %v1420, %v1419
    %v1622 = vpack.c.b16 %v1422, %v1421
    %v1623 = vpack.c.b16 %v1424, %v1423
    %v1624 = vpack.c.b16 %v1426, %v1425
    %v1625 = vpack.c.b16 %v1428, %v1427
    %v1626 = vpack.c.b16 %v1430, %v1429
    %v1627 = vpack.c.b16 %v1432, %v1431
    %v1628 = vpack.c.b16 %v1434, %v1433
    %v1629 = vpack.c.b16 %v1436, %v1435
    %v1630 = vpack.c.b16 %v1438, %v1437
    %1823 = vmatprep.subr.bf16.mxu0 0
    %1824 = vmatpush1.bf16.msra.mxu0 %v1439
    %1825 = vmatprep.subr.bf16.mxu0 0
    %1826 = vmatpush1.bf16.msra.mxu0 %v1440
    %1827 = vmatprep.subr.bf16.mxu0 0
    %1828 = vmatpush1.bf16.msra.mxu0 %v1441
    %1829 = vmatprep.subr.bf16.mxu0 0
    %1830 = vmatpush1.bf16.msra.mxu0 %v1442
    %1831 = vmatprep.subr.bf16.mxu0 0
    %1832 = vmatpush1.bf16.msra.mxu0 %v1443
    %1833 = vmatprep.subr.bf16.mxu0 0
    %1834 = vmatpush1.bf16.msra.mxu0 %v1444
    %1835 = vmatprep.subr.bf16.mxu0 0
    %1836 = vmatpush1.bf16.msra.mxu0 %v1445
    %1837 = vmatprep.subr.bf16.mxu0 0
    %1838 = vmatpush1.bf16.msra.mxu0 %v1446
    %1839 = vmatprep.subr.bf16.mxu0 0
    %1840 = vmatpush1.bf16.msra.mxu0 %v1447
    %1841 = vmatprep.subr.bf16.mxu0 0
    %1842 = vmatpush1.bf16.msra.mxu0 %v1448
    %1843 = vmatprep.subr.bf16.mxu0 0
    %1844 = vmatpush1.bf16.msra.mxu0 %v1449
    %1845 = vmatprep.subr.bf16.mxu0 0
    %1846 = vmatpush1.bf16.msra.mxu0 %v1450
    %1847 = vmatprep.subr.bf16.mxu0 0
    %1848 = vmatpush1.bf16.msra.mxu0 %v1451
    %1849 = vmatprep.subr.bf16.mxu0 0
    %1850 = vmatpush1.bf16.msra.mxu0 %v1452
    %1851 = vmatprep.subr.bf16.mxu0 0
    %1852 = vmatpush1.bf16.msra.mxu0 %v1453
    %1853 = vmatprep.subr.bf16.mxu0 0
    %1854 = vmatpush1.bf16.msra.mxu0 %v1454
    %1855 = vmatprep.mubr.bf16.mxu0 %v499
    %1856 = vmatmul.mubr.bf16.gmra.mrb[0].mxu0 %v485
    %v1857 = vpop.f32.mrb[0].mxu0
    %v1858 = vadd.f32 %v429, %v1857
    %v1859 = vpop.f32.mrb[0].mxu0
    %v1860 = vpop.f32.mrb[0].mxu0
    %v1861 = vpop.f32.mrb[0].mxu0
    %1862 = vdwg.mxu0
    %1863 = vmatprep.subr.bf16.mxu0 0
    %1864 = vmatpush1.bf16.msra.mxu0 %v1455
    %1865 = vmatprep.subr.bf16.mxu0 0
    %1866 = vmatpush1.bf16.msra.mxu0 %v1456
    %1867 = vmatprep.subr.bf16.mxu0 0
    %1868 = vmatpush1.bf16.msra.mxu0 %v1457
    %1869 = vmatprep.subr.bf16.mxu0 0
    %1870 = vmatpush1.bf16.msra.mxu0 %v1458
    %1871 = vmatprep.subr.bf16.mxu0 0
    %1872 = vmatpush1.bf16.msra.mxu0 %v1459
    %1873 = vmatprep.subr.bf16.mxu0 0
    %1874 = vmatpush1.bf16.msra.mxu0 %v1460
    %1875 = vmatprep.subr.bf16.mxu0 0
    %1876 = vmatpush1.bf16.msra.mxu0 %v1461
    %1877 = vmatprep.subr.bf16.mxu0 0
    %1878 = vmatpush1.bf16.msra.mxu0 %v1462
    %1879 = vmatprep.subr.bf16.mxu0 0
    %1880 = vmatpush1.bf16.msra.mxu0 %v1463
    %1881 = vmatprep.subr.bf16.mxu0 0
    %1882 = vmatpush1.bf16.msra.mxu0 %v1464
    %1883 = vmatprep.subr.bf16.mxu0 0
    %1884 = vmatpush1.bf16.msra.mxu0 %v1465
    %1885 = vmatprep.subr.bf16.mxu0 0
    %1886 = vmatpush1.bf16.msra.mxu0 %v1466
    %1887 = vmatprep.subr.bf16.mxu0 0
    %1888 = vmatpush1.bf16.msra.mxu0 %v1467
    %1889 = vmatprep.subr.bf16.mxu0 0
    %1890 = vmatpush1.bf16.msra.mxu0 %v1468
    %1891 = vmatprep.subr.bf16.mxu0 0
    %1892 = vmatpush1.bf16.msra.mxu0 %v1469
    %1893 = vmatprep.subr.bf16.mxu0 0
    %1894 = vmatpush1.bf16.msra.mxu0 %v1470
    %1895 = vmatprep.mubr.bf16.mxu0 %v509
    %1896 = vmatmul.mubr.bf16.gmra.mrb[0].mxu0 %v507
    %v1897 = vpop.f32.mrb[0].mxu0
    %v1898 = vadd.f32 %v1858, %v1897
    %v1899 = vpop.f32.mrb[0].mxu0
    %v1900 = vpop.f32.mrb[0].mxu0
    %v1901 = vpop.f32.mrb[0].mxu0
    %1902 = vdwg.mxu0
    %1903 = vmatprep.subr.bf16.mxu0 0
    %1904 = vmatpush1.bf16.msra.mxu0 %v1471
    %1905 = vmatprep.subr.bf16.mxu0 0
    %1906 = vmatpush1.bf16.msra.mxu0 %v1472
    %1907 = vmatprep.subr.bf16.mxu0 0
    %1908 = vmatpush1.bf16.msra.mxu0 %v1473
    %1909 = vmatprep.subr.bf16.mxu0 0
    %1910 = vmatpush1.bf16.msra.mxu0 %v1474
    %1911 = vmatprep.subr.bf16.mxu0 0
    %1912 = vmatpush1.bf16.msra.mxu0 %v1475
    %1913 = vmatprep.subr.bf16.mxu0 0
    %1914 = vmatpush1.bf16.msra.mxu0 %v1476
    %1915 = vmatprep.subr.bf16.mxu0 0
    %1916 = vmatpush1.bf16.msra.mxu0 %v1477
    %1917 = vmatprep.subr.bf16.mxu0 0
    %1918 = vmatpush1.bf16.msra.mxu0 %v1478
    %1919 = vmatprep.subr.bf16.mxu0 0
    %1920 = vmatpush1.bf16.msra.mxu0 %v1479
    %1921 = vmatprep.subr.bf16.mxu0 0
    %1922 = vmatpush1.bf16.msra.mxu0 %v1480
    %1923 = vmatprep.subr.bf16.mxu0 0
    %1924 = vmatpush1.bf16.msra.mxu0 %v1481
    %1925 = vmatprep.subr.bf16.mxu0 0
    %1926 = vmatpush1.bf16.msra.mxu0 %v1482
    %1927 = vmatprep.subr.bf16.mxu0 0
    %1928 = vmatpush1.bf16.msra.mxu0 %v1483
    %1929 = vmatprep.subr.bf16.mxu0 0
    %1930 = vmatpush1.bf16.msra.mxu0 %v1484
    %1931 = vmatprep.subr.bf16.mxu0 0
    %1932 = vmatpush1.bf16.msra.mxu0 %v1485
    %1933 = vmatprep.subr.bf16.mxu0 0
    %1934 = vmatpush1.bf16.msra.mxu0 %v1486
    %1935 = vmatprep.mubr.bf16.mxu0 %v506
    %1936 = vmatmul.mubr.bf16.gmra.mrb[0].mxu0 %v492
    %v1937 = vpop.f32.mrb[0].mxu0
    %v1938 = vadd.f32 %v1898, %v1937
    %v1939 = vpop.f32.mrb[0].mxu0
    %v1940 = vpop.f32.mrb[0].mxu0
    %v1941 = vpop.f32.mrb[0].mxu0
    %1942 = vdwg.mxu0
    %1943 = vmatprep.subr.bf16.mxu0 0
    %1944 = vmatpush1.bf16.msra.mxu0 %v1487
    %1945 = vmatprep.subr.bf16.mxu0 0
    %1946 = vmatpush1.bf16.msra.mxu0 %v1488
    %1947 = vmatprep.subr.bf16.mxu0 0
    %1948 = vmatpush1.bf16.msra.mxu0 %v1489
    %1949 = vmatprep.subr.bf16.mxu0 0
    %1950 = vmatpush1.bf16.msra.mxu0 %v1490
    %1951 = vmatprep.subr.bf16.mxu0 0
    %1952 = vmatpush1.bf16.msra.mxu0 %v1491
    %1953 = vmatprep.subr.bf16.mxu0 0
    %1954 = vmatpush1.bf16.msra.mxu0 %v1492
    %1955 = vmatprep.subr.bf16.mxu0 0
    %1956 = vmatpush1.bf16.msra.mxu0 %v1493
    %1957 = vmatprep.subr.bf16.mxu0 0
    %1958 = vmatpush1.bf16.msra.mxu0 %v1494
    %1959 = vmatprep.subr.bf16.mxu0 0
    %1960 = vmatpush1.bf16.msra.mxu0 %v1495
    %1961 = vmatprep.subr.bf16.mxu0 0
    %1962 = vmatpush1.bf16.msra.mxu0 %v1496
    %1963 = vmatprep.subr.bf16.mxu0 0
    %1964 = vmatpush1.bf16.msra.mxu0 %v1497
    %1965 = vmatprep.subr.bf16.mxu0 0
    %1966 = vmatpush1.bf16.msra.mxu0 %v1498
    %1967 = vmatprep.subr.bf16.mxu0 0
    %1968 = vmatpush1.bf16.msra.mxu0 %v1499
    %1969 = vmatprep.subr.bf16.mxu0 0
    %1970 = vmatpush1.bf16.msra.mxu0 %v1500
    %1971 = vmatprep.subr.bf16.mxu0 0
    %1972 = vmatpush1.bf16.msra.mxu0 %v1501
    %1973 = vmatprep.subr.bf16.mxu0 0
    %1974 = vmatpush1.bf16.msra.mxu0 %v1502
    %1975 = vmatprep.mubr.bf16.mxu0 %v510
    %1976 = vmatmul.mubr.bf16.gmra.mrb[0].mxu0 %v508
    %v1977 = vpop.f32.mrb[0].mxu0
    %v1978 = vadd.f32 %v1938, %v1977
    %v1979 = vpop.f32.mrb[0].mxu0
    %v1980 = vpop.f32.mrb[0].mxu0
    %v1981 = vpop.f32.mrb[0].mxu0
    %1982 = vdwg.mxu0
    %1983 = vmatprep.subr.bf16.mxu0 0
    %1984 = vmatpush1.bf16.msra.mxu0 %v1503
    %1985 = vmatprep.subr.bf16.mxu0 0
    %1986 = vmatpush1.bf16.msra.mxu0 %v1504
    %1987 = vmatprep.subr.bf16.mxu0 0
    %1988 = vmatpush1.bf16.msra.mxu0 %v1505
    %1989 = vmatprep.subr.bf16.mxu0 0
    %1990 = vmatpush1.bf16.msra.mxu0 %v1506
    %1991 = vmatprep.subr.bf16.mxu0 0
    %1992 = vmatpush1.bf16.msra.mxu0 %v1507
    %1993 = vmatprep.subr.bf16.mxu0 0
    %1994 = vmatpush1.bf16.msra.mxu0 %v1508
    %1995 = vmatprep.subr.bf16.mxu0 0
    %1996 = vmatpush1.bf16.msra.mxu0 %v1509
    %1997 = vmatprep.subr.bf16.mxu0 0
    %1998 = vmatpush1.bf16.msra.mxu0 %v1510
    %1999 = vmatprep.subr.bf16.mxu0 0
    %2000 = vmatpush1.bf16.msra.mxu0 %v1511
    %2001 = vmatprep.subr.bf16.mxu0 0
    %2002 = vmatpush1.bf16.msra.mxu0 %v1512
    %2003 = vmatprep.subr.bf16.mxu0 0
    %2004 = vmatpush1.bf16.msra.mxu0 %v1513
    %2005 = vmatprep.subr.bf16.mxu0 0
    %2006 = vmatpush1.bf16.msra.mxu0 %v1514
    %2007 = vmatprep.subr.bf16.mxu0 0
    %2008 = vmatpush1.bf16.msra.mxu0 %v1515
    %2009 = vmatprep.subr.bf16.mxu0 0
    %2010 = vmatpush1.bf16.msra.mxu0 %v1516
    %2011 = vmatprep.subr.bf16.mxu0 0
    %2012 = vmatpush1.bf16.msra.mxu0 %v1517
    %2013 = vmatprep.subr.bf16.mxu0 0
    %2014 = vmatpush1.bf16.msra.mxu0 %v1518
    %2015 = vmatprep.mubr.bf16.mxu0 %v567
    %2016 = vmatmul.mubr.bf16.gmra.mrb[0].mxu0 %v553
    %v2017 = vpop.f32.mrb[0].mxu0
    %v2018 = vadd.f32 %v1978, %v2017
    %v2019 = vpop.f32.mrb[0].mxu0
    %v2020 = vpop.f32.mrb[0].mxu0
    %v2021 = vpop.f32.mrb[0].mxu0
    %2022 = vdwg.mxu0
    %2023 = vmatprep.subr.bf16.mxu0 0
    %2024 = vmatpush1.bf16.msra.mxu0 %v1519
    %2025 = vmatprep.subr.bf16.mxu0 0
    %2026 = vmatpush1.bf16.msra.mxu0 %v1520
    %2027 = vmatprep.subr.bf16.mxu0 0
    %2028 = vmatpush1.bf16.msra.mxu0 %v1521
    %2029 = vmatprep.subr.bf16.mxu0 0
    %2030 = vmatpush1.bf16.msra.mxu0 %v1522
    %2031 = vmatprep.subr.bf16.mxu0 0
    %2032 = vmatpush1.bf16.msra.mxu0 %v1523
    %2033 = vmatprep.subr.bf16.mxu0 0
    %2034 = vmatpush1.bf16.msra.mxu0 %v1524
    %2035 = vmatprep.subr.bf16.mxu0 0
    %2036 = vmatpush1.bf16.msra.mxu0 %v1525
    %2037 = vmatprep.subr.bf16.mxu0 0
    %2038 = vmatpush1.bf16.msra.mxu0 %v1526
    %2039 = vmatprep.subr.bf16.mxu0 0
    %2040 = vmatpush1.bf16.msra.mxu0 %v1527
    %2041 = vmatprep.subr.bf16.mxu0 0
    %2042 = vmatpush1.bf16.msra.mxu0 %v1528
    %2043 = vmatprep.subr.bf16.mxu0 0
    %2044 = vmatpush1.bf16.msra.mxu0 %v1529
    %2045 = vmatprep.subr.bf16.mxu0 0
    %2046 = vmatpush1.bf16.msra.mxu0 %v1530
    %2047 = vmatprep.subr.bf16.mxu0 0
    %2048 = vmatpush1.bf16.msra.mxu0 %v1531
    %2049 = vmatprep.subr.bf16.mxu0 0
    %2050 = vmatpush1.bf16.msra.mxu0 %v1532
    %2051 = vmatprep.subr.bf16.mxu0 0
    %2052 = vmatpush1.bf16.msra.mxu0 %v1533
    %2053 = vmatprep.subr.bf16.mxu0 0
    %2054 = vmatpush1.bf16.msra.mxu0 %v1534
    %2055 = vmatprep.mubr.bf16.mxu0 %v577
    %2056 = vmatmul.mubr.bf16.gmra.mrb[0].mxu0 %v575
    %v2057 = vpop.f32.mrb[0].mxu0
    %v2058 = vadd.f32 %v2018, %v2057
    %v2059 = vpop.f32.mrb[0].mxu0
    %v2060 = vpop.f32.mrb[0].mxu0
    %v2061 = vpop.f32.mrb[0].mxu0
    %2062 = vdwg.mxu0
    %2063 = vmatprep.subr.bf16.mxu0 0
    %2064 = vmatpush1.bf16.msra.mxu0 %v1535
    %2065 = vmatprep.subr.bf16.mxu0 0
    %2066 = vmatpush1.bf16.msra.mxu0 %v1536
    %2067 = vmatprep.subr.bf16.mxu0 0
    %2068 = vmatpush1.bf16.msra.mxu0 %v1537
    %2069 = vmatprep.subr.bf16.mxu0 0
    %2070 = vmatpush1.bf16.msra.mxu0 %v1538
    %2071 = vmatprep.subr.bf16.mxu0 0
    %2072 = vmatpush1.bf16.msra.mxu0 %v1539
    %2073 = vmatprep.subr.bf16.mxu0 0
    %2074 = vmatpush1.bf16.msra.mxu0 %v1540
    %2075 = vmatprep.subr.bf16.mxu0 0
    %2076 = vmatpush1.bf16.msra.mxu0 %v1541
    %2077 = vmatprep.subr.bf16.mxu0 0
    %2078 = vmatpush1.bf16.msra.mxu0 %v1542
    %2079 = vmatprep.subr.bf16.mxu0 0
    %2080 = vmatpush1.bf16.msra.mxu0 %v1543
    %2081 = vmatprep.subr.bf16.mxu0 0
    %2082 = vmatpush1.bf16.msra.mxu0 %v1544
    %2083 = vmatprep.subr.bf16.mxu0 0
    %2084 = vmatpush1.bf16.msra.mxu0 %v1545
    %2085 = vmatprep.subr.bf16.mxu0 0
    %2086 = vmatpush1.bf16.msra.mxu0 %v1546
    %2087 = vmatprep.subr.bf16.mxu0 0
    %2088 = vmatpush1.bf16.msra.mxu0 %v1547
    %2089 = vmatprep.subr.bf16.mxu0 0
    %2090 = vmatpush1.bf16.msra.mxu0 %v1548
    %2091 = vmatprep.subr.bf16.mxu0 0
    %2092 = vmatpush1.bf16.msra.mxu0 %v1549
    %2093 = vmatprep.subr.bf16.mxu0 0
    %2094 = vmatpush1.bf16.msra.mxu0 %v1550
    %2095 = vmatprep.mubr.bf16.mxu0 %v574
    %2096 = vmatmul.mubr.bf16.gmra.mrb[0].mxu0 %v560
    %v2097 = vpop.f32.mrb[0].mxu0
    %v2098 = vadd.f32 %v2058, %v2097
    %v2099 = vpop.f32.mrb[0].mxu0
    %v2100 = vpop.f32.mrb[0].mxu0
    %v2101 = vpop.f32.mrb[0].mxu0
    %2102 = vdwg.mxu0
    %2103 = vmatprep.subr.bf16.mxu0 0
    %2104 = vmatpush1.bf16.msra.mxu0 %v1551
    %2105 = vmatprep.subr.bf16.mxu0 0
    %2106 = vmatpush1.bf16.msra.mxu0 %v1552
    %2107 = vmatprep.subr.bf16.mxu0 0
    %2108 = vmatpush1.bf16.msra.mxu0 %v1553
    %2109 = vmatprep.subr.bf16.mxu0 0
    %2110 = vmatpush1.bf16.msra.mxu0 %v1554
    %2111 = vmatprep.subr.bf16.mxu0 0
    %2112 = vmatpush1.bf16.msra.mxu0 %v1555
    %2113 = vmatprep.subr.bf16.mxu0 0
    %2114 = vmatpush1.bf16.msra.mxu0 %v1556
    %2115 = vmatprep.subr.bf16.mxu0 0
    %2116 = vmatpush1.bf16.msra.mxu0 %v1557
    %2117 = vmatprep.subr.bf16.mxu0 0
    %2118 = vmatpush1.bf16.msra.mxu0 %v1558
    %2119 = vmatprep.subr.bf16.mxu0 0
    %2120 = vmatpush1.bf16.msra.mxu0 %v1559
    %2121 = vmatprep.subr.bf16.mxu0 0
    %2122 = vmatpush1.bf16.msra.mxu0 %v1560
    %2123 = vmatprep.subr.bf16.mxu0 0
    %2124 = vmatpush1.bf16.msra.mxu0 %v1561
    %2125 = vmatprep.subr.bf16.mxu0 0
    %2126 = vmatpush1.bf16.msra.mxu0 %v1562
    %2127 = vmatprep.subr.bf16.mxu0 0
    %2128 = vmatpush1.bf16.msra.mxu0 %v1563
    %2129 = vmatprep.subr.bf16.mxu0 0
    %2130 = vmatpush1.bf16.msra.mxu0 %v1564
    %2131 = vmatprep.subr.bf16.mxu0 0
    %2132 = vmatpush1.bf16.msra.mxu0 %v1565
    %2133 = vmatprep.subr.bf16.mxu0 0
    %2134 = vmatpush1.bf16.msra.mxu0 %v1566
    %2135 = vmatprep.mubr.bf16.mxu0 %v578
    %2136 = vmatmul.mubr.bf16.gmra.mrb[0].mxu0 %v576
    %v2137 = vpop.f32.mrb[0].mxu0
    %v2138 = vadd.f32 %v2098, %v2137
    %v2139 = vpop.f32.mrb[0].mxu0
    %v2140 = vpop.f32.mrb[0].mxu0
    %v2141 = vpop.f32.mrb[0].mxu0
    %2142 = vdwg.mxu0
    %2143 = vmatprep.subr.bf16.mxu0 0
    %2144 = vmatpush1.bf16.msra.mxu0 %v1567
    %2145 = vmatprep.subr.bf16.mxu0 0
    %2146 = vmatpush1.bf16.msra.mxu0 %v1568
    %2147 = vmatprep.subr.bf16.mxu0 0
    %2148 = vmatpush1.bf16.msra.mxu0 %v1569
    %2149 = vmatprep.subr.bf16.mxu0 0
    %2150 = vmatpush1.bf16.msra.mxu0 %v1570
    %2151 = vmatprep.subr.bf16.mxu0 0
    %2152 = vmatpush1.bf16.msra.mxu0 %v1571
    %2153 = vmatprep.subr.bf16.mxu0 0
    %2154 = vmatpush1.bf16.msra.mxu0 %v1572
    %2155 = vmatprep.subr.bf16.mxu0 0
    %2156 = vmatpush1.bf16.msra.mxu0 %v1573
    %2157 = vmatprep.subr.bf16.mxu0 0
    %2158 = vmatpush1.bf16.msra.mxu0 %v1574
    %2159 = vmatprep.subr.bf16.mxu0 0
    %2160 = vmatpush1.bf16.msra.mxu0 %v1575
    %2161 = vmatprep.subr.bf16.mxu0 0
    %2162 = vmatpush1.bf16.msra.mxu0 %v1576
    %2163 = vmatprep.subr.bf16.mxu0 0
    %2164 = vmatpush1.bf16.msra.mxu0 %v1577
    %2165 = vmatprep.subr.bf16.mxu0 0
    %2166 = vmatpush1.bf16.msra.mxu0 %v1578
    %2167 = vmatprep.subr.bf16.mxu0 0
    %2168 = vmatpush1.bf16.msra.mxu0 %v1579
    %2169 = vmatprep.subr.bf16.mxu0 0
    %2170 = vmatpush1.bf16.msra.mxu0 %v1580
    %2171 = vmatprep.subr.bf16.mxu0 0
    %2172 = vmatpush1.bf16.msra.mxu0 %v1581
    %2173 = vmatprep.subr.bf16.mxu0 0
    %2174 = vmatpush1.bf16.msra.mxu0 %v1582
    %2175 = vmatprep.mubr.bf16.mxu0 %v635
    %2176 = vmatmul.mubr.bf16.gmra.mrb[0].mxu0 %v621
    %v2177 = vpop.f32.mrb[0].mxu0
    %v2178 = vadd.f32 %v2138, %v2177
    %v2179 = vpop.f32.mrb[0].mxu0
    %v2180 = vpop.f32.mrb[0].mxu0
    %v2181 = vpop.f32.mrb[0].mxu0
    %2182 = vdwg.mxu0
    %2183 = vmatprep.subr.bf16.mxu0 0
    %2184 = vmatpush1.bf16.msra.mxu0 %v1583
    %2185 = vmatprep.subr.bf16.mxu0 0
    %2186 = vmatpush1.bf16.msra.mxu0 %v1584
    %2187 = vmatprep.subr.bf16.mxu0 0
    %2188 = vmatpush1.bf16.msra.mxu0 %v1585
    %2189 = vmatprep.subr.bf16.mxu0 0
    %2190 = vmatpush1.bf16.msra.mxu0 %v1586
    %2191 = vmatprep.subr.bf16.mxu0 0
    %2192 = vmatpush1.bf16.msra.mxu0 %v1587
    %2193 = vmatprep.subr.bf16.mxu0 0
    %2194 = vmatpush1.bf16.msra.mxu0 %v1588
    %2195 = vmatprep.subr.bf16.mxu0 0
    %2196 = vmatpush1.bf16.msra.mxu0 %v1589
    %2197 = vmatprep.subr.bf16.mxu0 0
    %2198 = vmatpush1.bf16.msra.mxu0 %v1590
    %2199 = vmatprep.subr.bf16.mxu0 0
    %2200 = vmatpush1.bf16.msra.mxu0 %v1591
    %2201 = vmatprep.subr.bf16.mxu0 0
    %2202 = vmatpush1.bf16.msra.mxu0 %v1592
    %2203 = vmatprep.subr.bf16.mxu0 0
    %2204 = vmatpush1.bf16.msra.mxu0 %v1593
    %2205 = vmatprep.subr.bf16.mxu0 0
    %2206 = vmatpush1.bf16.msra.mxu0 %v1594
    %2207 = vmatprep.subr.bf16.mxu0 0
    %2208 = vmatpush1.bf16.msra.mxu0 %v1595
    %2209 = vmatprep.subr.bf16.mxu0 0
    %2210 = vmatpush1.bf16.msra.mxu0 %v1596
    %2211 = vmatprep.subr.bf16.mxu0 0
    %2212 = vmatpush1.bf16.msra.mxu0 %v1597
    %2213 = vmatprep.subr.bf16.mxu0 0
    %2214 = vmatpush1.bf16.msra.mxu0 %v1598
    %2215 = vmatprep.mubr.bf16.mxu0 %v645
    %2216 = vmatmul.mubr.bf16.gmra.mrb[0].mxu0 %v643
    %v2217 = vpop.f32.mrb[0].mxu0
    %v2218 = vadd.f32 %v2178, %v2217
    %v2219 = vpop.f32.mrb[0].mxu0
    %v2220 = vpop.f32.mrb[0].mxu0
    %v2221 = vpop.f32.mrb[0].mxu0
    %2222 = vdwg.mxu0
    %2223 = vmatprep.subr.bf16.mxu0 0
    %2224 = vmatpush1.bf16.msra.mxu0 %v1599
    %2225 = vmatprep.subr.bf16.mxu0 0
    %2226 = vmatpush1.bf16.msra.mxu0 %v1600
    %2227 = vmatprep.subr.bf16.mxu0 0
    %2228 = vmatpush1.bf16.msra.mxu0 %v1601
    %2229 = vmatprep.subr.bf16.mxu0 0
    %2230 = vmatpush1.bf16.msra.mxu0 %v1602
    %2231 = vmatprep.subr.bf16.mxu0 0
    %2232 = vmatpush1.bf16.msra.mxu0 %v1603
    %2233 = vmatprep.subr.bf16.mxu0 0
    %2234 = vmatpush1.bf16.msra.mxu0 %v1604
    %2235 = vmatprep.subr.bf16.mxu0 0
    %2236 = vmatpush1.bf16.msra.mxu0 %v1605
    %2237 = vmatprep.subr.bf16.mxu0 0
    %2238 = vmatpush1.bf16.msra.mxu0 %v1606
    %2239 = vmatprep.subr.bf16.mxu0 0
    %2240 = vmatpush1.bf16.msra.mxu0 %v1607
    %2241 = vmatprep.subr.bf16.mxu0 0
    %2242 = vmatpush1.bf16.msra.mxu0 %v1608
    %2243 = vmatprep.subr.bf16.mxu0 0
    %2244 = vmatpush1.bf16.msra.mxu0 %v1609
    %2245 = vmatprep.subr.bf16.mxu0 0
    %2246 = vmatpush1.bf16.msra.mxu0 %v1610
    %2247 = vmatprep.subr.bf16.mxu0 0
    %2248 = vmatpush1.bf16.msra.mxu0 %v1611
    %2249 = vmatprep.subr.bf16.mxu0 0
    %2250 = vmatpush1.bf16.msra.mxu0 %v1612
    %2251 = vmatprep.subr.bf16.mxu0 0
    %2252 = vmatpush1.bf16.msra.mxu0 %v1613
    %2253 = vmatprep.subr.bf16.mxu0 0
    %2254 = vmatpush1.bf16.msra.mxu0 %v1614
    %2255 = vmatprep.mubr.bf16.mxu0 %v642
    %2256 = vmatmul.mubr.bf16.gmra.mrb[0].mxu0 %v628
    %v2257 = vpop.f32.mrb[0].mxu0
    %v2258 = vadd.f32 %v2218, %v2257
    %v2259 = vpop.f32.mrb[0].mxu0
    %v2260 = vpop.f32.mrb[0].mxu0
    %v2261 = vpop.f32.mrb[0].mxu0
    %2262 = vdwg.mxu0
    %2263 = vmatprep.subr.bf16.mxu0 0
    %2264 = vmatpush1.bf16.msra.mxu0 %v1615
    %2265 = vmatprep.subr.bf16.mxu0 0
    %2266 = vmatpush1.bf16.msra.mxu0 %v1616
    %2267 = vmatprep.subr.bf16.mxu0 0
    %2268 = vmatpush1.bf16.msra.mxu0 %v1617
    %2269 = vmatprep.subr.bf16.mxu0 0
    %2270 = vmatpush1.bf16.msra.mxu0 %v1618
    %2271 = vmatprep.subr.bf16.mxu0 0
    %2272 = vmatpush1.bf16.msra.mxu0 %v1619
    %2273 = vmatprep.subr.bf16.mxu0 0
    %2274 = vmatpush1.bf16.msra.mxu0 %v1620
    %2275 = vmatprep.subr.bf16.mxu0 0
    %2276 = vmatpush1.bf16.msra.mxu0 %v1621
    %2277 = vmatprep.subr.bf16.mxu0 0
    %2278 = vmatpush1.bf16.msra.mxu0 %v1622
    %2279 = vmatprep.subr.bf16.mxu0 0
    %2280 = vmatpush1.bf16.msra.mxu0 %v1623
    %2281 = vmatprep.subr.bf16.mxu0 0
    %2282 = vmatpush1.bf16.msra.mxu0 %v1624
    %2283 = vmatprep.subr.bf16.mxu0 0
    %2284 = vmatpush1.bf16.msra.mxu0 %v1625
    %2285 = vmatprep.subr.bf16.mxu0 0
    %2286 = vmatpush1.bf16.msra.mxu0 %v1626
    %2287 = vmatprep.subr.bf16.mxu0 0
    %2288 = vmatpush1.bf16.msra.mxu0 %v1627
    %2289 = vmatprep.subr.bf16.mxu0 0
    %2290 = vmatpush1.bf16.msra.mxu0 %v1628
    %2291 = vmatprep.subr.bf16.mxu0 0
    %2292 = vmatpush1.bf16.msra.mxu0 %v1629
    %2293 = vmatprep.subr.bf16.mxu0 0
    %2294 = vmatpush1.bf16.msra.mxu0 %v1630
    %2295 = vmatprep.mubr.bf16.mxu0 %v646
    %2296 = vmatmul.mubr.bf16.gmra.mrb[0].mxu0 %v644
    %v2297 = vpop.f32.mrb[0].mxu0
    %v2298 = vadd.f32 %v2258, %v2297
    %v2299 = vpop.f32.mrb[0].mxu0
    %v2300 = vpop.f32.mrb[0].mxu0
    %v2301 = vpop.f32.mrb[0].mxu0
    %2302 = vdwg.mxu0
    %v2303 = vmax.f32 %v2298, 0.0
    %v2304 = vld [vmem:[%s3] sm:$0xff]
    %v2305 = vld [vmem:[%s3 + $0x8] sm:$0xff]
    %v2306 = vld [vmem:[%s3 + $0x10] sm:$0xff]
    %v2307 = vld [vmem:[%s3 + $0x18] sm:$0xff]
    %v2308 = vld [vmem:[%s3 + $0x20] sm:$0xff]
    %v2309 = vld [vmem:[%s3 + $0x28] sm:$0xff]
    %v2310 = vld [vmem:[%s3 + $0x30] sm:$0xff]
    %v2311 = vld [vmem:[%s3 + $0x38] sm:$0xff]
    %v2312 = vld [vmem:[%s4] sm:$0x1]
    %v2314 = vlaneseq
    %v2315 = vshrl.u32 %v2314, 7
    %v2316 = vsub.s32 0, %v2315
    %v2317 = vrot.slane %v2312, %v2316
    %vm2319 = vcmask 523264
    %v2321 = vsel %vm2319, %v2303, 0
    %2323 = vmatprep.subr.mxu0 0.0
    %2324 = vmatpush1.msra.mxu0 %v2304
    %2325 = vmatprep.subr.mxu0 0.0
    %2326 = vmatpush1.msra.mxu0 %v2305
    %2327 = vmatprep.subr.mxu0 0.0
    %2328 = vmatpush1.msra.mxu0 %v2306
    %2329 = vmatprep.subr.mxu0 0.0
    %2330 = vmatpush1.msra.mxu0 %v2307
    %2331 = vmatprep.subr.mxu0 0.0
    %2332 = vmatpush1.msra.mxu0 %v2308
    %2333 = vmatprep.subr.mxu0 0.0
    %2334 = vmatpush1.msra.mxu0 %v2309
    %2335 = vmatprep.subr.mxu0 0.0
    %2336 = vmatpush1.msra.mxu0 %v2310
    %2337 = vmatprep.subr.mxu0 0.0
    %2338 = vmatpush1.msra.mxu0 %v2311
    %2339 = vmatprep.subr.mxu0 0.0
    %2340 = vmatpush1.msra.mxu0 0.0
    %2341 = vmatprep.subr.mxu0 0.0
    %2342 = vmatpush1.msra.mxu0 0.0
    %2343 = vmatprep.subr.mxu0 0.0
    %2344 = vmatpush1.msra.mxu0 0.0
    %2345 = vmatprep.subr.mxu0 0.0
    %2346 = vmatpush1.msra.mxu0 0.0
    %2347 = vmatprep.subr.mxu0 0.0
    %2348 = vmatpush1.msra.mxu0 0.0
    %2349 = vmatprep.subr.mxu0 0.0
    %2350 = vmatpush1.msra.mxu0 0.0
    %2351 = vmatprep.subr.mxu0 0.0
    %2352 = vmatpush1.msra.mxu0 0.0
    %2353 = vmatprep.subr.mxu0 0.0
    %2354 = vmatpush1.msra.mxu0 0.0
    %2355 = vmatprep.subr.mxu0 0.0
    %2356 = vmatpush1.msra.mxu0 0.0
    %2357 = vmatprep.subr.mxu0 0.0
    %2358 = vmatpush1.msra.mxu0 0.0
    %2359 = vmatprep.subr.mxu0 0.0
    %2360 = vmatpush1.msra.mxu0 0.0
    %2361 = vmatprep.subr.mxu0 0.0
    %2362 = vmatpush1.msra.mxu0 0.0
    %2363 = vmatprep.subr.mxu0 0.0
    %2364 = vmatpush1.msra.mxu0 0.0
    %2365 = vmatprep.subr.mxu0 0.0
    %2366 = vmatpush1.msra.mxu0 0.0
    %2367 = vmatprep.subr.mxu0 0.0
    %2368 = vmatpush1.msra.mxu0 0.0
    %2369 = vmatprep.subr.mxu0 0.0
    %2370 = vmatpush1.msra.mxu0 0.0
    %2371 = vmatprep.subr.mxu0 0.0
    %2372 = vmatpush1.msra.mxu0 0.0
    %2373 = vmatprep.subr.mxu0 0.0
    %2374 = vmatpush1.msra.mxu0 0.0
    %2375 = vmatprep.subr.mxu0 0.0
    %2376 = vmatpush1.msra.mxu0 0.0
    %2377 = vmatprep.subr.mxu0 0.0
    %2378 = vmatpush1.msra.mxu0 0.0
    %2379 = vmatprep.subr.mxu0 0.0
    %2380 = vmatpush1.msra.mxu0 0.0
    %2381 = vmatprep.subr.mxu0 0.0
    %2382 = vmatpush1.msra.mxu0 0.0
    %2383 = vmatprep.subr.mxu0 0.0
    %2384 = vmatpush1.msra.mxu0 0.0
    %2385 = vmatprep.subr.mxu0 0.0
    %2386 = vmatpush1.msra.mxu0 0.0
    %2387 = vmatprep.mubr.f32.mxu0 0.0
    %2388 = vmatmul.mubr.f32.gmra.mrb[0].mxu0 %v2321
    %v2389 = vpop.f32.mrb[0].mxu0
    %v2390 = vadd.f32 %v2317, %v2389
    %v2391 = vpop.f32.mrb[0].mxu0
    %2392 = vdwg.mxu0
    %v2393 = vmax.f32 %v2390, 0.0
    %v2394 = vld [vmem:[%s5] sm:$0xff]
    %v2395 = vld [vmem:[%s5 + $0x8] sm:$0xff]
    %v2396 = vld [vmem:[%s5 + $0x10] sm:$0xff]
    %v2397 = vld [vmem:[%s5 + $0x18] sm:$0xff]
    %v2398 = vld [vmem:[%s6] sm:$0x1]
    %v2400 = vlaneseq
    %v2401 = vshrl.u32 %v2400, 7
    %v2402 = vsub.s32 0, %v2401
    %v2403 = vrot.slane %v2398, %v2402
    %vm2405 = vcmask 261120
    %v2407 = vsel %vm2405, %v2393, 0
    %2409 = vmatprep.subr.mxu0 0.0
    %2410 = vmatpush1.msra.mxu0 %v2394
    %2411 = vmatprep.subr.mxu0 0.0
    %2412 = vmatpush1.msra.mxu0 %v2395
    %2413 = vmatprep.subr.mxu0 0.0
    %2414 = vmatpush1.msra.mxu0 %v2396
    %2415 = vmatprep.subr.mxu0 0.0
    %2416 = vmatpush1.msra.mxu0 %v2397
    %2417 = vmatprep.subr.mxu0 0.0
    %2418 = vmatpush1.msra.mxu0 0.0
    %2419 = vmatprep.subr.mxu0 0.0
    %2420 = vmatpush1.msra.mxu0 0.0
    %2421 = vmatprep.subr.mxu0 0.0
    %2422 = vmatpush1.msra.mxu0 0.0
    %2423 = vmatprep.subr.mxu0 0.0
    %2424 = vmatpush1.msra.mxu0 0.0
    %2425 = vmatprep.subr.mxu0 0.0
    %2426 = vmatpush1.msra.mxu0 0.0
    %2427 = vmatprep.subr.mxu0 0.0
    %2428 = vmatpush1.msra.mxu0 0.0
    %2429 = vmatprep.subr.mxu0 0.0
    %2430 = vmatpush1.msra.mxu0 0.0
    %2431 = vmatprep.subr.mxu0 0.0
    %2432 = vmatpush1.msra.mxu0 0.0
    %2433 = vmatprep.subr.mxu0 0.0
    %2434 = vmatpush1.msra.mxu0 0.0
    %2435 = vmatprep.subr.mxu0 0.0
    %2436 = vmatpush1.msra.mxu0 0.0
    %2437 = vmatprep.subr.mxu0 0.0
    %2438 = vmatpush1.msra.mxu0 0.0
    %2439 = vmatprep.subr.mxu0 0.0
    %2440 = vmatpush1.msra.mxu0 0.0
    %2441 = vmatprep.subr.mxu0 0.0
    %2442 = vmatpush1.msra.mxu0 0.0
    %2443 = vmatprep.subr.mxu0 0.0
    %2444 = vmatpush1.msra.mxu0 0.0
    %2445 = vmatprep.subr.mxu0 0.0
    %2446 = vmatpush1.msra.mxu0 0.0
    %2447 = vmatprep.subr.mxu0 0.0
    %2448 = vmatpush1.msra.mxu0 0.0
    %2449 = vmatprep.subr.mxu0 0.0
    %2450 = vmatpush1.msra.mxu0 0.0
    %2451 = vmatprep.subr.mxu0 0.0
    %2452 = vmatpush1.msra.mxu0 0.0
    %2453 = vmatprep.subr.mxu0 0.0
    %2454 = vmatpush1.msra.mxu0 0.0
    %2455 = vmatprep.subr.mxu0 0.0
    %2456 = vmatpush1.msra.mxu0 0.0
    %2457 = vmatprep.subr.mxu0 0.0
    %2458 = vmatpush1.msra.mxu0 0.0
    %2459 = vmatprep.subr.mxu0 0.0
    %2460 = vmatpush1.msra.mxu0 0.0
    %2461 = vmatprep.subr.mxu0 0.0
    %2462 = vmatpush1.msra.mxu0 0.0
    %2463 = vmatprep.subr.mxu0 0.0
    %2464 = vmatpush1.msra.mxu0 0.0
    %2465 = vmatprep.subr.mxu0 0.0
    %2466 = vmatpush1.msra.mxu0 0.0
    %2467 = vmatprep.subr.mxu0 0.0
    %2468 = vmatpush1.msra.mxu0 0.0
    %2469 = vmatprep.subr.mxu0 0.0
    %2470 = vmatpush1.msra.mxu0 0.0
    %2471 = vmatprep.subr.mxu0 0.0
    %2472 = vmatpush1.msra.mxu0 0.0
    %2473 = vmatprep.mubr.f32.mxu0 0.0
    %2474 = vmatmul.mubr.f32.gmra.mrb[0].mxu0 %v2407
    %v2475 = vpop.f32.mrb[0].mxu0
    %v2476 = vadd.f32 %v2403, %v2475
    %v2477 = vpop.f32.mrb[0].mxu0
    %2478 = vdwg.mxu0
    %vm2479 = vcmask 80896
    %v2480 = vsel %vm2479, %v2476, -inf
    %2481 = vmax.xlane.f32.xlu0 %v2480
    %v2482 = vpop.xlane.xlu0 %2481
    %v2483 = vsub.f32 %v2476, %v2482
    %v2484 = vmul.f32 %v2483, 1.442695
    %v2485 = vpow.pop %v2484
    %v2486 = vsel %vm2479, %v2485, 0.0
    %2487 = vadd.xlane.f32.xlu0 %v2486
    %v2488 = vpop.xlane.xlu0 %2487
    %v2489 = vlog2.pop %v2488
    %v2490 = vmul.f32 %v2489, 0.6931472
    %v2491 = vsub.f32 %v2483, %v2490
    %2492 = vst.msk [vmem:[#allocation2] sm:$0xff] %vm2479, %v2491
    // Predicated region
    $region30: #{tpu_custom_call.1} parent=1 // pred_check
      _
    $region31: #{tpu_custom_call.1} parent=1 // pred_check_branch
      %2494 = sbr.rel (0) target = $region33
    $region32: #{tpu_custom_call.1} parent=1 // pred_region
      %s2496 = ssub.s32 128, 32
      %2497 = vsyncadd [#allocation3], %s2496
      %s2498 = sshll.u32 [#allocation2], 4
      %s2499 = int_to_ptr.vmem [resolvable:$true] %s2498
      %2504 = dma.vmem_to_hbm [thread:$0]  %s2499, 32, %s7, [#allocation3], 32, 32, 2
    $region33: #{tpu_custom_call.1} parent=1 // pred_fallthru
      _
    // Predicated region
    $region34: #{tpu_custom_call.1} parent=1 // pred_check
      _
    $region35: #{tpu_custom_call.1} parent=1 // pred_check_branch
      %2506 = sbr.rel (0) target = $region37
    $region36: #{tpu_custom_call.1} parent=1 // pred_region
      %2507 = dma.done [#allocation3], 128
    $region37: #{tpu_custom_call.1} parent=1 // pred_fallthru
      _
    %2508 = vsyncpa [#allocation3], 1

</llo_original>
